<compile_context>
chip_gen: v5e
topology: v5e:2x2
jax: 0.10.0
libtpu: 0.0.40
codegen_flags: <defaults>
</compile_context>

<pallas_src>
import jax
import jax.numpy as jnp
from jax.experimental import pallas as pl
from jax.experimental.pallas import tpu as pltpu

INPUT_SIZE = 512     # backbone embedding dim (InceptionResnetV1 output)
HIDDEN_SIZE = 256    # GRU hidden
FC_SIZE = 64
OUTPUT_DIM = 8
GATE_DIM = 3 * HIDDEN_SIZE   # PyTorch GRU gate order [r, z, n]


def _full_block(shape):
    """BlockSpec covering the whole array (grid=(1,))."""
    nd = len(shape)
    return pl.BlockSpec(shape, lambda i, _nd=nd: (0,) * _nd)


def _pick_tile(dim, max_tile, quantum):
    """Largest tile <= max_tile that divides `dim` and is a multiple of `quantum`.
    Falls back to the full extent (always legal) if dim isn't quantum-aligned."""
    if dim % quantum != 0:
        return dim
    t = min(dim, max_tile)
    t = (t // quantum) * quantum
    while dim % t != 0:
        t -= quantum
    return t


# --------------------------------------------------------------------------
# Kernel 1: frozen backbone stand-in + hoisted GRU input projection.
#
#   feats = x_flat @ w_bb + b_bb          (accumulated over K tiles)
#   gi    = feats  @ w_ih + b_ih          (epilogue at the last K step)
#
# TODO(synk): the real InceptionResnetV1(pretrained='vggface2') backbone is an
# external pretrained CNN; it is stood in here by one frozen linear projection
# (C*H*W -> 512) so the rest of the forward pass is exact.
# --------------------------------------------------------------------------
def backbone_proj_kernel(x_ref, wbb_ref, bbb_ref, wih_ref, bih_ref, gi_ref, acc_ref):
    k = pl.program_id(1)

    @pl.when(k == 0)
    def _():
        acc_ref[...] = jnp.zeros_like(acc_ref)

    acc_ref[...] += jnp.dot(x_ref[...].astype(jnp.bfloat16), wbb_ref[...],
                            preferred_element_type=jnp.float32)

    @pl.when(k == pl.num_programs(1) - 1)
    def _():
        feats = acc_ref[...] + bbb_ref[...]                       # (tm, 512) f32
        gi_ref[...] = (jnp.dot(feats.astype(jnp.bfloat16), wih_ref[...],
                               preferred_element_type=jnp.float32)
                       + bih_ref[...])                            # (tm, 768) f32


def backbone_proj_forward(x_flat, p):
    M, K = x_flat.shape
    F, G = INPUT_SIZE, GATE_DIM
    # Tile sizes chosen to fit comfortably in the 32 MiB scoped VMEM default on
    # all generations (v5e/v6e/v7x), with BlockSpec double-buffering.
    tm = _pick_tile(M, 256, 8)
    tk = _pick_tile(K, 512, 128)
    gm, gk = M // tm, K // tk
    return pl.pallas_call(
        backbone_proj_kernel,
        out_shape=jax.ShapeDtypeStruct((M, G), jnp.float32),
        grid=(gm, gk),
        in_specs=[
            pl.BlockSpec((tm, tk), lambda i, k: (i, k)),   # x rows / K tile
            pl.BlockSpec((tk, F), lambda i, k: (k, 0)),    # w_bb K tile  (bf16)
            pl.BlockSpec((1, F), lambda i, k: (0, 0)),     # b_bb
            pl.BlockSpec((F, G), lambda i, k: (0, 0)),     # w_ih (bf16, resident)
            pl.BlockSpec((1, G), lambda i, k: (0, 0)),     # b_ih
        ],
        out_specs=pl.BlockSpec((tm, G), lambda i, k: (i, 0)),
        scratch_shapes=[pltpu.VMEM((tm, F), jnp.float32)],
        compiler_params=pltpu.CompilerParams(
            dimension_semantics=("parallel", "arbitrary")),
    )(x_flat,
      p["w_bb"], p["b_bb"].reshape(1, F),
      p["w_ih"], p["b_ih"].reshape(1, G))


# --------------------------------------------------------------------------
# Kernel 2: GRU recurrence (h path only; x path already folded into `gi`)
#           + fc + fc_output + softmax, fused.
#
# PyTorch gate order [r, z, n]:
#   r = sigmoid(gi_r + h W_hr + b_hr)
#   z = sigmoid(gi_z + h W_hz + b_hz)
#   n = tanh  (gi_n + r * (h W_hn + b_hn))
#   h = (1 - z) * n + z * h
# gru(x)[:, -1, :] for one unidirectional layer is h_S.
# --------------------------------------------------------------------------
def gru_head_kernel(gi_ref, whh_ref, bhh_ref,
                    wfc_ref, bfc_ref, wout_ref, bout_ref, o_ref):
    B, S, _ = gi_ref.shape
    H = whh_ref.shape[0]

    h = jnp.zeros((B, H), jnp.float32)
    # S is small & static -> full unroll (fori_loop overhead dominates otherwise).
    for t in range(S):
        gi_t = gi_ref[:, t, :]                                        # (B, 3H) f32
        gh = (jnp.dot(h.astype(jnp.bfloat16), whh_ref[...],
                      preferred_element_type=jnp.float32)
              + bhh_ref[...])                                         # (B, 3H) f32
        r = jax.nn.sigmoid(gi_t[:, 0 * H:1 * H] + gh[:, 0 * H:1 * H])
        z = jax.nn.sigmoid(gi_t[:, 1 * H:2 * H] + gh[:, 1 * H:2 * H])
        n = jnp.tanh(gi_t[:, 2 * H:3 * H] + r * gh[:, 2 * H:3 * H])
        h = (1.0 - z) * n + z * h

    y = jnp.dot(h, wfc_ref[...], preferred_element_type=jnp.float32) + bfc_ref[...]
    y = jnp.dot(y, wout_ref[...], preferred_element_type=jnp.float32) + bout_ref[...]

    # numerically-stable softmax; reciprocal on the EUP slot + 1 Newton refinement
    y = y - jnp.max(y, axis=-1, keepdims=True)
    e = jnp.exp(y)
    s = jnp.sum(e, axis=-1, keepdims=True)
    inv = pl.reciprocal(s, approx=True)
    inv = inv * (2.0 - s * inv)
    o_ref[...] = e * inv


def gru_head_forward(gi_bsg, p):
    B, S, G = gi_bsg.shape
    H = HIDDEN_SIZE
    return pl.pallas_call(
        gru_head_kernel,
        out_shape=jax.ShapeDtypeStruct((B, OUTPUT_DIM), jnp.float32),
        grid=(1,),
        in_specs=[
            _full_block((B, S, G)),
            _full_block((H, G)),
            _full_block((1, G)),
            _full_block((H, FC_SIZE)),
            _full_block((1, FC_SIZE)),
            _full_block((FC_SIZE, OUTPUT_DIM)),
            _full_block((1, OUTPUT_DIM)),
        ],
        out_specs=_full_block((B, OUTPUT_DIM)),
        compiler_params=pltpu.CompilerParams(dimension_semantics=("arbitrary",)),
    )(gi_bsg,
      p["w_hh"], p["b_hh"].reshape(1, G),
      p["w_fc"], p["b_fc"].reshape(1, FC_SIZE),
      p["w_out"], p["b_out"].reshape(1, OUTPUT_DIM))


# --------------------------------------------------------------------------
# Full forward pass (plain-JAX glue: only free reshapes, no transposes)
# --------------------------------------------------------------------------
def baseline_model_expr_forward(x, params):
    B, S, C, H, W = x.shape
    x_flat = x.reshape(B * S, C * H * W).astype(jnp.float32)      # view(B*S, C*H*W)
    gi = backbone_proj_forward(x_flat, params)                    # (B*S, 3H) f32
    gi = gi.reshape(B, S, GATE_DIM)                               # free view
    return gru_head_forward(gi, params)                           # (B, 8) softmax


# --------------------------------------------------------------------------
# Deterministic parameter init (mirrors PyTorch default uniform inits).
# Frozen / GRU weight matrices are stored in bf16; biases & head in f32.
# NOTE: GRU weights are stored transposed vs. torch ((F,3H) here vs (3H,F)).
# --------------------------------------------------------------------------
def init_params(key, img_feat_dim):
    ks = jax.random.split(key, 12)
    H, F = HIDDEN_SIZE, INPUT_SIZE

    def uni(k, shape, bound):
        return jax.random.uniform(k, shape, jnp.float32, -bound, bound)

    kg = 1.0 / jnp.sqrt(H)          # GRU init bound
    kfc = 1.0 / jnp.sqrt(H)         # fc fan_in = 256
    kout = 1.0 / jnp.sqrt(FC_SIZE)  # fc_output fan_in = 64
    kbb = 1.0 / jnp.sqrt(img_feat_dim)

    return {
        # frozen backbone stand-in
        "w_bb":  uni(ks[0], (img_feat_dim, F), kbb).astype(jnp.bfloat16),
        "b_bb":  uni(ks[1], (F,), kbb),
        # GRU (gate order r, z, n)
        "w_ih":  uni(ks[2], (F, 3 * H), kg).astype(jnp.bfloat16),
        "w_hh":  uni(ks[3], (H, 3 * H), kg).astype(jnp.bfloat16),
        "b_ih":  uni(ks[4], (3 * H,), kg),
        "b_hh":  uni(ks[5], (3 * H,), kg),
        # heads (trainable -> f32)
        "w_fc":  uni(ks[6], (H, FC_SIZE), kfc),
        "b_fc":  uni(ks[7], (FC_SIZE,), kfc),
        "w_out": uni(ks[8], (FC_SIZE, OUTPUT_DIM), kout),
        "b_out": uni(ks[9], (OUTPUT_DIM,), kout),
    }


# --------------------------------------------------------------------------
# Pure-JAX reference (same bf16 weight precision) for correctness checking.
# --------------------------------------------------------------------------
def reference_forward(x, p):
    B, S, C, H, W = x.shape
    Hh = HIDDEN_SIZE
    xf = x.reshape(B * S, C * H * W).astype(jnp.float32)
    feats = jnp.dot(xf.astype(jnp.bfloat16), p["w_bb"],
                    preferred_element_type=jnp.float32) + p["b_bb"]
    gi = jnp.dot(feats.astype(jnp.bfloat16), p["w_ih"],
                 preferred_element_type=jnp.float32) + p["b_ih"]
    gi = gi.reshape(B, S, GATE_DIM)
    h = jnp.zeros((B, Hh), jnp.float32)
    for t in range(S):
        gh = jnp.dot(h.astype(jnp.bfloat16), p["w_hh"],
                     preferred_element_type=jnp.float32) + p["b_hh"]
        gi_t = gi[:, t, :]
        r = jax.nn.sigmoid(gi_t[:, :Hh] + gh[:, :Hh])
        z = jax.nn.sigmoid(gi_t[:, Hh:2 * Hh] + gh[:, Hh:2 * Hh])
        n = jnp.tanh(gi_t[:, 2 * Hh:] + r * gh[:, 2 * Hh:])
        h = (1.0 - z) * n + z * h
    y = h @ p["w_fc"] + p["b_fc"]
    y = y @ p["w_out"] + p["b_out"]
    return jax.nn.softmax(y, axis=-1)


if __name__ == "__main__":
    B, S, C, H, W = 2, 8, 3, 16, 16
    key = jax.random.PRNGKey(0)
    kx, kp = jax.random.split(key)

    x = jax.random.normal(kx, (B, S, C, H, W), dtype=jnp.float32)
    params = init_params(kp, C * H * W)

    out = baseline_model_expr_forward(x, params)
    out = jax.block_until_ready(out)

    assert out.shape == (B, OUTPUT_DIM)
    assert bool(jnp.all(jnp.isfinite(out)))
    # softmax rows sum to 1
    assert bool(jnp.allclose(jnp.sum(out, axis=-1), 1.0, atol=1e-4))
    # matches the pure-JAX reference (same bf16 weight precision)
    ref = jax.block_until_ready(reference_forward(x, params))
    assert bool(jnp.allclose(out, ref, atol=2e-3, rtol=2e-2))
    print("KERNEL_OK")
</pallas_src>

<mosaic_0001>
module attributes {stable_mosaic.version = 11 : i64} {
  func.func @backbone_proj_kernel(%arg0: i32, %arg1: i32, %arg2: memref<16x384xf32, #tpu.memory_space<vmem>>, %arg3: memref<384x512xbf16, #tpu.memory_space<vmem>>, %arg4: memref<1x512xf32, #tpu.memory_space<vmem>>, %arg5: memref<512x768xbf16, #tpu.memory_space<vmem>>, %arg6: memref<1x768xf32, #tpu.memory_space<vmem>>, %arg7: memref<16x768xf32, #tpu.memory_space<vmem>>, %arg8: memref<16x512xf32, #tpu.memory_space<vmem>>) attributes {dimension_semantics = [#tpu.dimension_semantics<parallel>, #tpu.dimension_semantics<arbitrary>], iteration_bounds = array<i64: 1, 2>, scalar_prefetch = 0 : i64, scratch_operands = 1 : i64, tpu.core_type = #tpu.core_type<tc>, window_params = [{transform_indices = @transform_0, window_bounds = array<i64: 16, 384>}, {transform_indices = @transform_1, window_bounds = array<i64: 384, 512>}, {pipeline_mode = #tpu.pipeline_mode<synchronous>, transform_indices = @transform_2, window_bounds = array<i64: 1, 512>}, {pipeline_mode = #tpu.pipeline_mode<synchronous>, transform_indices = @transform_3, window_bounds = array<i64: 512, 768>}, {pipeline_mode = #tpu.pipeline_mode<synchronous>, transform_indices = @transform_4, window_bounds = array<i64: 1, 768>}, {transform_indices = @transform_5, window_bounds = array<i64: 16, 768>}]} {
    %c0_i32 = arith.constant 0 : i32
    %0 = arith.cmpi eq, %arg1, %c0_i32 : i32
    %1 = arith.extui %0 : i1 to i32
    %c0_i32_0 = arith.constant 0 : i32
    %2 = arith.cmpi ne, %1, %c0_i32_0 : i32
    scf.if %2 {
      %cst_9 = arith.constant 0.000000e+00 : f32
      %13 = vector.broadcast %cst_9 : f32 to vector<16x512xf32>
      %c0_10 = arith.constant 0 : index
      %c0_11 = arith.constant 0 : index
      %14 = vector.load %arg8[%c0_10, %c0_11] : memref<16x512xf32, #tpu.memory_space<vmem>>, vector<16x512xf32>
      tpu.vector_store %arg8[%c0_10, %c0_11], %13 {strides = array<i32>} : memref<16x512xf32, #tpu.memory_space<vmem>>, vector<16x512xf32>,
    } else {
    }
    %c0 = arith.constant 0 : index
    %c0_1 = arith.constant 0 : index
    %3 = vector.load %arg8[%c0, %c0_1] : memref<16x512xf32, #tpu.memory_space<vmem>>, vector<16x512xf32>
    %c0_2 = arith.constant 0 : index
    %c0_3 = arith.constant 0 : index
    %4 = vector.load %arg2[%c0_2, %c0_3] : memref<16x384xf32, #tpu.memory_space<vmem>>, vector<16x384xf32>
    %5 = arith.truncf %4 : vector<16x384xf32> to vector<16x384xbf16>
    %c0_4 = arith.constant 0 : index
    %c0_5 = arith.constant 0 : index
    %6 = vector.load %arg3[%c0_4, %c0_5] : memref<384x512xbf16, #tpu.memory_space<vmem>>, vector<384x512xbf16>
    %cst = arith.constant dense<0.000000e+00> : vector<16x512xf32>
    %7 = tpu.matmul %5, %6, %cst {dimension_numbers = #tpu.dot_dimension_numbers<[1], [0], [0], [1], [0, 0, 1, 1], [], []>} : vector<16x384xbf16>, vector<384x512xbf16>, vector<16x512xf32> -> vector<16x512xf32>
    %8 = arith.addf %3, %7 : vector<16x512xf32>
    %c0_6 = arith.constant 0 : index
    %c0_7 = arith.constant 0 : index
    %9 = vector.load %arg8[%c0_6, %c0_7] : memref<16x512xf32, #tpu.memory_space<vmem>>, vector<16x512xf32>
    tpu.vector_store %arg8[%c0_6, %c0_7], %8 {strides = array<i32>} : memref<16x512xf32, #tpu.memory_space<vmem>>, vector<16x512xf32>,
    %c1_i32 = arith.constant 1 : i32
    %10 = arith.cmpi eq, %arg1, %c1_i32 : i32
    %11 = arith.extui %10 : i1 to i32
    %c0_i32_8 = arith.constant 0 : i32
    %12 = arith.cmpi ne, %11, %c0_i32_8 : i32
    scf.if %12 {
      %c0_9 = arith.constant 0 : index
      %c0_10 = arith.constant 0 : index
      %13 = vector.load %arg8[%c0_9, %c0_10] : memref<16x512xf32, #tpu.memory_space<vmem>>, vector<16x512xf32>
      %c0_11 = arith.constant 0 : index
      %c0_12 = arith.constant 0 : index
      %14 = vector.load %arg4[%c0_11, %c0_12] : memref<1x512xf32, #tpu.memory_space<vmem>>, vector<1x512xf32>
      %15 = vector.broadcast %14 : vector<1x512xf32> to vector<16x512xf32>
      %16 = arith.addf %13, %15 : vector<16x512xf32>
      %17 = arith.truncf %16 : vector<16x512xf32> to vector<16x512xbf16>
      %c0_13 = arith.constant 0 : index
      %c0_14 = arith.constant 0 : index
      %18 = vector.load %arg5[%c0_13, %c0_14] : memref<512x768xbf16, #tpu.memory_space<vmem>>, vector<512x768xbf16>
      %cst_15 = arith.constant dense<0.000000e+00> : vector<16x768xf32>
      %19 = tpu.matmul %17, %18, %cst_15 {dimension_numbers = #tpu.dot_dimension_numbers<[1], [0], [0], [1], [0, 0, 1, 1], [], []>} : vector<16x512xbf16>, vector<512x768xbf16>, vector<16x768xf32> -> vector<16x768xf32>
      %c0_16 = arith.constant 0 : index
      %c0_17 = arith.constant 0 : index
      %20 = vector.load %arg6[%c0_16, %c0_17] : memref<1x768xf32, #tpu.memory_space<vmem>>, vector<1x768xf32>
      %21 = vector.broadcast %20 : vector<1x768xf32> to vector<16x768xf32>
      %22 = arith.addf %19, %21 : vector<16x768xf32>
      %c0_18 = arith.constant 0 : index
      %c0_19 = arith.constant 0 : index
      %23 = vector.load %arg7[%c0_18, %c0_19] : memref<16x768xf32, #tpu.memory_space<vmem>>, vector<16x768xf32>
      tpu.vector_store %arg7[%c0_18, %c0_19], %22 {strides = array<i32>} : memref<16x768xf32, #tpu.memory_space<vmem>>, vector<16x768xf32>,
    } else {
    }
    return
  }
  func.func @transform_0(%arg0: i32, %arg1: i32) -> (i32, i32) {
    %c0_i32 = arith.constant 0 : i32
    return %arg0, %arg1 : i32, i32
  }
  func.func @transform_1(%arg0: i32, %arg1: i32) -> (i32, i32) {
    %c0_i32 = arith.constant 0 : i32
    %c0_i32_0 = arith.constant 0 : i32
    return %arg1, %c0_i32 : i32, i32
  }
  func.func @transform_2(%arg0: i32, %arg1: i32) -> (i32, i32) {
    %c0_i32 = arith.constant 0 : i32
    %c0_i32_0 = arith.constant 0 : i32
    %c0_i32_1 = arith.constant 0 : i32
    return %c0_i32, %c0_i32_0 : i32, i32
  }
  func.func @transform_3(%arg0: i32, %arg1: i32) -> (i32, i32) {
    %c0_i32 = arith.constant 0 : i32
    %c0_i32_0 = arith.constant 0 : i32
    %c0_i32_1 = arith.constant 0 : i32
    return %c0_i32, %c0_i32_0 : i32, i32
  }
  func.func @transform_4(%arg0: i32, %arg1: i32) -> (i32, i32) {
    %c0_i32 = arith.constant 0 : i32
    %c0_i32_0 = arith.constant 0 : i32
    %c0_i32_1 = arith.constant 0 : i32
    return %c0_i32, %c0_i32_0 : i32, i32
  }
  func.func @transform_5(%arg0: i32, %arg1: i32) -> (i32, i32) {
    %c0_i32 = arith.constant 0 : i32
    %c0_i32_0 = arith.constant 0 : i32
    return %arg0, %c0_i32 : i32, i32
  }
}

</mosaic_0001>

<llo_original>
// kernel: tpu_custom_call.1
$region0: #{tpu_custom_call.1}
  #allocation0 [shape = 'u32[]', space=smem, size = 0x4, offset = 0x4, fixed_abs, tag = 'smem constant byte address 0x4 - core index']
  #allocation1 [shape = 'u32[72,128]{1,0:T(1,128)}', space=vmem, size = 0x9000, scoped, tag = 'internal scratch']
  #allocation2 [shape = 'f32[16,512]{1,0:T(8,128)}', space=vmem, size = 0x8000, scoped, tag = 'scratch operand']
  %s0 = inlined_call_operand.hbm [shape: f32[16,768], index: 0, kind: input, shape index: {}]
  %s1 = inlined_call_operand.hbm [shape: bf16[768,512], index: 1, kind: input, shape index: {}]
  %s2 = inlined_call_operand.hbm [shape: f32[1,512], index: 2, kind: input, shape index: {}]
  %s3 = inlined_call_operand.hbm [shape: bf16[512,768], index: 3, kind: input, shape index: {}]
  %s4 = inlined_call_operand.hbm [shape: f32[1,768], index: 4, kind: input, shape index: {}]
  %s5 = inlined_call_operand.hbm [shape: f32[16,768], index: 5, kind: output, shape index: {}]
  %s6 = sld [smem:[#allocation0]]
  $region81: #{tpu_custom_call.1} parent=0
    _
  %s8 = ssub.s32 1, %s6
  %s9 = scalar_select 0, %s8, %s6
  $region1: #{tpu_custom_call.1} parent=0
    #allocation3 [shape = 'u8[49152]{0}', space=vmem, size = 0xc000, scoped, tag = 'input window, operand 0']
    #allocation4 [shape = 's32[2]{0}', space=sflag, size = 0x8, scoped, tag = 'scoped memory for tpu_custom_call.1']
    #allocation5 [shape = 's32[2]{0}', space=sflag, size = 0x8, scoped, tag = 'scoped memory for tpu_custom_call.1']
    #allocation6 [shape = 'u8[786432]{0}', space=vmem, size = 0xc0000, scoped, tag = 'input window, operand 1']
    #allocation7 [shape = 's32[2]{0}', space=sflag, size = 0x8, scoped, tag = 'scoped memory for tpu_custom_call.1']
    #allocation8 [shape = 'u8[2048]{0}', space=vmem, size = 0x800, scoped, tag = 'input window, operand 2, single buffered']
    #allocation9 [shape = 'u8[786432]{0}', space=vmem, size = 0xc0000, scoped, tag = 'input window, operand 3, single buffered']
    #allocation10 [shape = 's32[1]{0}', space=sflag, size = 0x4, scoped, tag = 'scoped memory for tpu_custom_call.1']
    #allocation11 [shape = 'u8[3072]{0}', space=vmem, size = 0xc00, scoped, tag = 'input window, operand 4, single buffered']
    #allocation12 [shape = 'u8[49152]{0}', space=vmem, size = 0xc000, scoped, tag = 'output window, operand 0, single buffered']
    %10 = vsyncpa [#allocation4], 0
    %s11 = scalar_lea.sflag [#allocation4], 1
    %12 = vsyncpa %s11, 0
    %13 = vsyncpa [#allocation7], 0
    %s14 = scalar_lea.sflag [#allocation7], 1
    %15 = vsyncpa %s14, 0
    %16 = vsyncpa [#allocation10], 0
    %17 = vsyncpa [#allocation5], 0
    loop: start=0, step=1, limit=4
    $region2: #{tpu_custom_call.1} parent=1 // loop_pre_header
      _
    $region3: #{tpu_custom_call.1} parent=1 // loop_header
      %s19 = sphi 0, %s23
      %p20 = scmp.ge.s32.totalorder %s19, 4
      %s26 = sphi 0, %s38
      %s27 = sphi 0, %s34
      %s28 = sphi 0, %s26
      %s29 = sphi 0, %s27
      %s30 = sphi 0, %s28
      %s31 = sphi 0, %s29
      %s43 = sphi 0, %s45
      %s46 = sphi 0, %s43
      %s47 = sphi 0, %s46
      %s63 = sphi 0, %s47
      %s69 = sphi 0, %s71
      %s72 = sphi 0, %s69
      %s73 = sphi 0, %s72
      %s89 = sphi 0, %s73
      %s93 = sphi 0, %s93
      %s95 = sphi 0, %s93
      %s96 = sphi 0, %s95
      %s110 = sphi 0, %s96
      %s114 = sphi 0, %s114
      %s116 = sphi 0, %s114
      %s117 = sphi 0, %s116
      %s131 = sphi 0, %s117
      %s135 = sphi 0, %s135
      %s137 = sphi 0, %s135
      %s138 = sphi 0, %s137
      %s152 = sphi 0, %s138
      %s158 = sphi 0, %s160
      %s161 = sphi 0, %s158
      %s162 = sphi 0, %s161
      %s178 = sphi 0, %s162
    $region4: #{tpu_custom_call.1} parent=1 // loop_header_branch
      %22 = sbr.rel (%p20) target = $region8
    $region5: #{tpu_custom_call.1} parent=1 // loop_body
      %s24 = ssub.s32 %s19, 1
      %s25 = ssub.s32 %s19, 2
      %s32 = sadd.s32 1, %s27
      %p33 = scmp.ge.s32.totalorder %s32, 2
      %s34 = scalar_select %p33, 0, %s32
      %s35 = sadd.s32 1, %s26
      %s36 = scalar_select %p33, %s35, %s26
      %p37 = scmp.ge.s32.totalorder %s36, 1
      %s38 = scalar_select %p37, 0, %s36
      %s39 = ssub.s32 %s26, %s38
      %s40 = ssub.s32 %s27, %s34
      %s41 = sor.u32 %s39, %s40
      %p42 = scmp.eq.s32.totalorder %s41, 0
      %s44 = sadd.s32 %s43, 1
      %s45 = scalar_select %p42, %s43, %s44
      %p48 = pneg %p42
      %p49 = scmp.eq.s32.totalorder %s19, 1
      %p50 = por %p48, %p49
      %p51 = scmp.ne.s32.totalorder %s43, %s46
      %p52 = scmp.eq.s32.totalorder %s19, 0
      %p53 = por %p51, %p52
      %p54 = scmp.ne.s32.totalorder %s43, %s46
      %p55 = scmp.eq.s32.totalorder %s24, 1
      %p56 = por %p54, %p55
      %p57 = scmp.ne.s32.totalorder %s46, %s47
      %p58 = scmp.eq.s32.totalorder %s24, 0
      %p59 = por %p57, %p58
      %p60 = scmp.ne.s32.totalorder %s46, %s47
      %p61 = scmp.eq.s32.totalorder %s25, 1
      %p62 = por %p60, %p61
      %p64 = scmp.ne.s32.totalorder %s47, %s63
      %p65 = scmp.eq.s32.totalorder %s25, 0
      %p66 = por %p64, %p65
      %s67 = ssub.s32 %s27, %s34
      %p68 = scmp.eq.s32.totalorder %s67, 0
      %s70 = sadd.s32 %s69, 1
      %s71 = scalar_select %p68, %s69, %s70
      %p74 = pneg %p68
      %p75 = scmp.eq.s32.totalorder %s19, 1
      %p76 = por %p74, %p75
      %p77 = scmp.ne.s32.totalorder %s69, %s72
      %p78 = scmp.eq.s32.totalorder %s19, 0
      %p79 = por %p77, %p78
      %p80 = scmp.ne.s32.totalorder %s69, %s72
      %p81 = scmp.eq.s32.totalorder %s24, 1
      %p82 = por %p80, %p81
      %p83 = scmp.ne.s32.totalorder %s72, %s73
      %p84 = scmp.eq.s32.totalorder %s24, 0
      %p85 = por %p83, %p84
      %p86 = scmp.ne.s32.totalorder %s72, %s73
      %p87 = scmp.eq.s32.totalorder %s25, 1
      %p88 = por %p86, %p87
      %p90 = scmp.ne.s32.totalorder %s73, %s89
      %p91 = scmp.eq.s32.totalorder %s25, 0
      %p92 = por %p90, %p91
      %s94 = sadd.s32 %s93, 1
      %p97 = scmp.eq.s32.totalorder %s19, 1
      %p98 = scmp.ne.s32.totalorder %s93, %s95
      %p99 = scmp.eq.s32.totalorder %s19, 0
      %p100 = por %p98, %p99
      %p101 = scmp.ne.s32.totalorder %s93, %s95
      %p102 = scmp.eq.s32.totalorder %s24, 1
      %p103 = por %p101, %p102
      %p104 = scmp.ne.s32.totalorder %s95, %s96
      %p105 = scmp.eq.s32.totalorder %s24, 0
      %p106 = por %p104, %p105
      %p107 = scmp.ne.s32.totalorder %s95, %s96
      %p108 = scmp.eq.s32.totalorder %s25, 1
      %p109 = por %p107, %p108
      %p111 = scmp.ne.s32.totalorder %s96, %s110
      %p112 = scmp.eq.s32.totalorder %s25, 0
      %p113 = por %p111, %p112
      %s115 = sadd.s32 %s114, 1
      %p118 = scmp.eq.s32.totalorder %s19, 1
      %p119 = scmp.ne.s32.totalorder %s114, %s116
      %p120 = scmp.eq.s32.totalorder %s19, 0
      %p121 = por %p119, %p120
      %p122 = scmp.ne.s32.totalorder %s114, %s116
      %p123 = scmp.eq.s32.totalorder %s24, 1
      %p124 = por %p122, %p123
      %p125 = scmp.ne.s32.totalorder %s116, %s117
      %p126 = scmp.eq.s32.totalorder %s24, 0
      %p127 = por %p125, %p126
      %p128 = scmp.ne.s32.totalorder %s116, %s117
      %p129 = scmp.eq.s32.totalorder %s25, 1
      %p130 = por %p128, %p129
      %p132 = scmp.ne.s32.totalorder %s117, %s131
      %p133 = scmp.eq.s32.totalorder %s25, 0
      %p134 = por %p132, %p133
      %s136 = sadd.s32 %s135, 1
      %p139 = scmp.eq.s32.totalorder %s19, 1
      %p140 = scmp.ne.s32.totalorder %s135, %s137
      %p141 = scmp.eq.s32.totalorder %s19, 0
      %p142 = por %p140, %p141
      %p143 = scmp.ne.s32.totalorder %s135, %s137
      %p144 = scmp.eq.s32.totalorder %s24, 1
      %p145 = por %p143, %p144
      %p146 = scmp.ne.s32.totalorder %s137, %s138
      %p147 = scmp.eq.s32.totalorder %s24, 0
      %p148 = por %p146, %p147
      %p149 = scmp.ne.s32.totalorder %s137, %s138
      %p150 = scmp.eq.s32.totalorder %s25, 1
      %p151 = por %p149, %p150
      %p153 = scmp.ne.s32.totalorder %s138, %s152
      %p154 = scmp.eq.s32.totalorder %s25, 0
      %p155 = por %p153, %p154
      %s156 = ssub.s32 %s26, %s38
      %p157 = scmp.eq.s32.totalorder %s156, 0
      %s159 = sadd.s32 %s158, 1
      %s160 = scalar_select %p157, %s158, %s159
      %p163 = pneg %p157
      %p164 = scmp.eq.s32.totalorder %s19, 1
      %p165 = por %p163, %p164
      %p166 = scmp.ne.s32.totalorder %s158, %s161
      %p167 = scmp.eq.s32.totalorder %s19, 0
      %p168 = por %p166, %p167
      %p169 = scmp.ne.s32.totalorder %s158, %s161
      %p170 = scmp.eq.s32.totalorder %s24, 1
      %p171 = por %p169, %p170
      %p172 = scmp.ne.s32.totalorder %s161, %s162
      %p173 = scmp.eq.s32.totalorder %s24, 0
      %p174 = por %p172, %p173
      %p175 = scmp.ne.s32.totalorder %s161, %s162
      %p176 = scmp.eq.s32.totalorder %s25, 1
      %p177 = por %p175, %p176
      %p179 = scmp.ne.s32.totalorder %s162, %s178
      %p180 = scmp.eq.s32.totalorder %s25, 0
      %p181 = por %p179, %p180
      %p182 = scmp.le.s32.totalorder 1, %s19
      %p183 = scmp.lt.s32.totalorder %s19, 3
      %p184 = pnand %p182, %p183
      %p185 = pneg %p184
      // Predicated region
      $region9: #{tpu_custom_call.1} parent=5 // pred_check
        _
      $region10: #{tpu_custom_call.1} parent=5 // pred_check_branch
        %187 = sbr.rel (%p184) target = $region12
      $region11: #{tpu_custom_call.1} parent=5 // pred_region
        %s188 = ssub.s32 %s19, 1
        // Predicated region
        $region13: #{tpu_custom_call.1} parent=11 // pred_check
          %p189 = pneg %p106
        $region14: #{tpu_custom_call.1} parent=11 // pred_check_branch
          %191 = sbr.rel (%p189) target = $region16
        $region15: #{tpu_custom_call.1} parent=11 // pred_region
          %193 = vsyncadd [#allocation7], 0
          %s195 = sshll.u32 %s2, 4
          %s196 = int_to_ptr.hbm [resolvable:$true] %s195
          %s197 = sshll.u32 [#allocation8], 4
          %s198 = int_to_ptr.vmem [resolvable:$true] %s197
          %200 = dma.hbm_to_vmem [thread:$0]  %s196, 64, %s198, [#allocation7]
        $region16: #{tpu_custom_call.1} parent=11 // pred_fallthru
          _
        // Predicated region
        $region17: #{tpu_custom_call.1} parent=11 // pred_check
          %p201 = pneg %p127
        $region18: #{tpu_custom_call.1} parent=11 // pred_check_branch
          %203 = sbr.rel (%p201) target = $region20
        $region19: #{tpu_custom_call.1} parent=11 // pred_region
          %205 = vsyncadd [#allocation10], 0
          %s206 = sshll.u32 %s3, 4
          %s207 = int_to_ptr.hbm [resolvable:$true] %s206
          %s208 = sshll.u32 [#allocation9], 4
          %s209 = int_to_ptr.vmem [resolvable:$true] %s208
          %214 = dma.hbm_to_vmem [thread:$0]  %s207, 24576, %s209, [#allocation10], 384, 384, 24
        $region20: #{tpu_custom_call.1} parent=11 // pred_fallthru
          _
        // Predicated region
        $region21: #{tpu_custom_call.1} parent=11 // pred_check
          %p215 = pneg %p148
        $region22: #{tpu_custom_call.1} parent=11 // pred_check_branch
          %217 = sbr.rel (%p215) target = $region24
        $region23: #{tpu_custom_call.1} parent=11 // pred_region
          %219 = vsyncadd [#allocation10], 0
          %s221 = sshll.u32 %s4, 4
          %s222 = int_to_ptr.hbm [resolvable:$true] %s221
          %s223 = sshll.u32 [#allocation11], 4
          %s224 = int_to_ptr.vmem [resolvable:$true] %s223
          %226 = dma.hbm_to_vmem [thread:$0]  %s222, 96, %s224, [#allocation10]
        $region24: #{tpu_custom_call.1} parent=11 // pred_fallthru
          _
      $region12: #{tpu_custom_call.1} parent=5 // pred_fallthru
        _
      %p227 = scmp.lt.s32.totalorder %s19, 2
      // Predicated region
      $region25: #{tpu_custom_call.1} parent=5 // pred_check
        %p228 = pneg %p227
      $region26: #{tpu_custom_call.1} parent=5 // pred_check_branch
        %230 = sbr.rel (%p228) target = $region28
      $region27: #{tpu_custom_call.1} parent=5 // pred_region
        // Predicated region
        $region29: #{tpu_custom_call.1} parent=27 // pred_check
          %p231 = pneg %p53
        $region30: #{tpu_custom_call.1} parent=27 // pred_check_branch
          %233 = sbr.rel (%p231) target = $region32
        $region31: #{tpu_custom_call.1} parent=27 // pred_region
          %s234 = sand.u32 %s43, 1
          %s235 = scalar_lea.sflag [#allocation4], %s234
          %s236 = sand.u32 %s43, 1
          %s237 = smul.addr %s236, 48
          %s238 = scalar_lea.vmem [#allocation3], %s237
          %s239 = smul.u32 2, %s26
          %s240 = smul.u32 3, %s27
          %242 = vsyncadd %s235, 0
          %s243 = smul.addr %s239, 6
          %s244 = sadd.s32 %s240, %s243
          %s245 = smul.addr %s244, 8
          %s246 = scalar_lea.hbm %s0, %s245
          %s247 = sshll.u32 %s246, 4
          %s248 = int_to_ptr.hbm [resolvable:$true] %s247
          %s249 = sshll.u32 %s238, 4
          %s250 = int_to_ptr.vmem [resolvable:$true] %s249
          %255 = dma.hbm_to_vmem [thread:$0]  %s248, 768, %s250, %s235, 768, 384, 24
        $region32: #{tpu_custom_call.1} parent=27 // pred_fallthru
          _
        // Predicated region
        $region33: #{tpu_custom_call.1} parent=27 // pred_check
          %p256 = pneg %p79
        $region34: #{tpu_custom_call.1} parent=27 // pred_check_branch
          %258 = sbr.rel (%p256) target = $region36
        $region35: #{tpu_custom_call.1} parent=27 // pred_region
          %s259 = sand.u32 %s19, 1
          %s260 = scalar_lea.sflag [#allocation7], %s259
          %s261 = sand.u32 %s69, 1
          %s262 = smul.addr %s261, 768
          %s263 = scalar_lea.vmem [#allocation6], %s262
          %s264 = smul.u32 48, %s27
          %266 = vsyncadd %s260, 0
          %s267 = smul.addr %s264, 4
          %s268 = smul.addr %s267, 4
          %s269 = scalar_lea.hbm %s1, %s268
          %s270 = sshll.u32 %s269, 4
          %s271 = int_to_ptr.hbm [resolvable:$true] %s270
          %s272 = sshll.u32 %s263, 4
          %s273 = int_to_ptr.vmem [resolvable:$true] %s272
          %278 = dma.hbm_to_vmem [thread:$0]  %s271, 12288, %s273, %s260, 256, 256, 16
        $region36: #{tpu_custom_call.1} parent=27 // pred_fallthru
          _
      $region28: #{tpu_custom_call.1} parent=5 // pred_fallthru
        _
      %p279 = scmp.le.s32.totalorder 1, %s19
      %p280 = scmp.lt.s32.totalorder %s19, 3
      %p281 = pnand %p279, %p280
      %p282 = pneg %p281
      // Predicated region
      $region37: #{tpu_custom_call.1} parent=5 // pred_check
        _
      $region38: #{tpu_custom_call.1} parent=5 // pred_check_branch
        %284 = sbr.rel (%p281) target = $region40
      $region39: #{tpu_custom_call.1} parent=5 // pred_region
        %s285 = ssub.s32 %s19, 1
        %s286 = sand.u32 %s46, 1
        %s287 = scalar_lea.sflag [#allocation4], %s286
        %s288 = sand.u32 %s46, 1
        %s289 = smul.addr %s288, 48
        %s290 = scalar_lea.vmem [#allocation3], %s289
        // Predicated region
        $region41: #{tpu_custom_call.1} parent=39 // pred_check
          %p291 = pneg %p59
        $region42: #{tpu_custom_call.1} parent=39 // pred_check_branch
          %293 = sbr.rel (%p291) target = $region44
        $region43: #{tpu_custom_call.1} parent=39 // pred_region
          %295 = dma.done %s287, 768
        $region44: #{tpu_custom_call.1} parent=39 // pred_fallthru
          _
        %s296 = sand.u32 %s24, 1
        %s297 = scalar_lea.sflag [#allocation7], %s296
        %s298 = sand.u32 %s72, 1
        %s299 = smul.addr %s298, 768
        %s300 = scalar_lea.vmem [#allocation6], %s299
        // Predicated region
        $region45: #{tpu_custom_call.1} parent=39 // pred_check
          %p301 = pneg %p85
        $region46: #{tpu_custom_call.1} parent=39 // pred_check_branch
          %303 = sbr.rel (%p301) target = $region48
        $region47: #{tpu_custom_call.1} parent=39 // pred_region
          %305 = dma.done %s297, 12288
        $region48: #{tpu_custom_call.1} parent=39 // pred_fallthru
          _
        // Predicated region
        $region49: #{tpu_custom_call.1} parent=39 // pred_check
          %p306 = pneg %p106
        $region50: #{tpu_custom_call.1} parent=39 // pred_check_branch
          %308 = sbr.rel (%p306) target = $region52
        $region51: #{tpu_custom_call.1} parent=39 // pred_region
          %310 = dma.done [#allocation7], 64
        $region52: #{tpu_custom_call.1} parent=39 // pred_fallthru
          _
        // Predicated region
        $region53: #{tpu_custom_call.1} parent=39 // pred_check
          %p311 = pneg %p127
        $region54: #{tpu_custom_call.1} parent=39 // pred_check_branch
          %313 = sbr.rel (%p311) target = $region56
        $region55: #{tpu_custom_call.1} parent=39 // pred_region
          %315 = dma.done [#allocation10], 24576
        $region56: #{tpu_custom_call.1} parent=39 // pred_fallthru
          _
        // Predicated region
        $region57: #{tpu_custom_call.1} parent=39 // pred_check
          %p316 = pneg %p148
        $region58: #{tpu_custom_call.1} parent=39 // pred_check_branch
          %318 = sbr.rel (%p316) target = $region60
        $region59: #{tpu_custom_call.1} parent=39 // pred_region
          %320 = dma.done [#allocation10], 96
        $region60: #{tpu_custom_call.1} parent=39 // pred_fallthru
          _
        %s321 = sand.u32 %s46, 1
        %s322 = scalar_lea.sflag [#allocation4], %s321
        %s323 = sand.u32 %s46, 1
        %s324 = smul.addr %s323, 48
        %s325 = scalar_lea.vmem [#allocation3], %s324
        %p326 = pneg %p59
        %p327 = pneg %p56
        %s328 = sand.u32 %s24, 1
        %s329 = scalar_lea.sflag [#allocation7], %s328
        %s330 = sand.u32 %s72, 1
        %s331 = smul.addr %s330, 768
        %s332 = scalar_lea.vmem [#allocation6], %s331
        %p333 = pneg %p85
        %p334 = pneg %p82
        %p335 = pneg %p106
        %p336 = pneg %p103
        %p337 = pneg %p127
        %p338 = pneg %p124
        %p339 = pneg %p148
        %p340 = pneg %p145
        %p341 = pneg %p174
        %p342 = pneg %p171
        %s343 = smul.u32 2, %s28
        %s344 = smul.u32 3, %s29
        %s345 = smul.u32 48, %s29
        %s346 = smul.u32 2, %s28
        %p347 = scmp.eq.s32.totalorder %s29, 0
        // Predicated region
        $region61: #{tpu_custom_call.1} parent=39 // pred_check
          %p348 = pneg %p347
        $region62: #{tpu_custom_call.1} parent=39 // pred_check_branch
          %350 = sbr.rel (%p348) target = $region64
        $region63: #{tpu_custom_call.1} parent=39 // pred_region
          %351 = vst [vmem:[#allocation2] sm:$0xff] 0.0
          %352 = vst [vmem:[#allocation2 + $0x8] sm:$0xff] 0.0
          %353 = vst [vmem:[#allocation2 + $0x10] sm:$0xff] 0.0
          %354 = vst [vmem:[#allocation2 + $0x18] sm:$0xff] 0.0
          %355 = vst [vmem:[#allocation2 + $0x20] sm:$0xff] 0.0
          %356 = vst [vmem:[#allocation2 + $0x28] sm:$0xff] 0.0
          %357 = vst [vmem:[#allocation2 + $0x30] sm:$0xff] 0.0
          %358 = vst [vmem:[#allocation2 + $0x38] sm:$0xff] 0.0
        $region64: #{tpu_custom_call.1} parent=39 // pred_fallthru
          _
        %v359 = vld [vmem:[#allocation2] sm:$0xff]
        %v360 = vld [vmem:[#allocation2 + $0x8] sm:$0xff]
        %v361 = vld [vmem:[#allocation2 + $0x10] sm:$0xff]
        %v362 = vld [vmem:[#allocation2 + $0x18] sm:$0xff]
        %v363 = vld [vmem:[#allocation2 + $0x20] sm:$0xff]
        %v364 = vld [vmem:[#allocation2 + $0x28] sm:$0xff]
        %v365 = vld [vmem:[#allocation2 + $0x30] sm:$0xff]
        %v366 = vld [vmem:[#allocation2 + $0x38] sm:$0xff]
        %v367 = vld [vmem:[%s290] sm:$0xff]
        %v368 = vld [vmem:[%s290 + $0x8] sm:$0xff]
        %v369 = vld [vmem:[%s290 + $0x10] sm:$0xff]
        %v370 = vld [vmem:[%s290 + $0x18] sm:$0xff]
        %v371 = vld [vmem:[%s290 + $0x20] sm:$0xff]
        %v372 = vld [vmem:[%s290 + $0x28] sm:$0xff]
        %v373 = vpack.c.bf16 %v370, %v367
        %v374 = vpack.c.bf16 %v371, %v368
        %v375 = vpack.c.bf16 %v372, %v369
        %v376 = vld [vmem:[%s300] sm:$0xff]
        %v377 = vld [vmem:[%s300 + $0x8] sm:$0xff]
        %v378 = vld [vmem:[%s300 + $0x10] sm:$0xff]
        %v379 = vld [vmem:[%s300 + $0x18] sm:$0xff]
        %v380 = vld [vmem:[%s300 + $0x20] sm:$0xff]
        %v381 = vld [vmem:[%s300 + $0x28] sm:$0xff]
        %v382 = vld [vmem:[%s300 + $0x30] sm:$0xff]
        %v383 = vld [vmem:[%s300 + $0x38] sm:$0xff]
        %v384 = vld [vmem:[%s300 + $0x40] sm:$0xff]
        %v385 = vld [vmem:[%s300 + $0x48] sm:$0xff]
        %v386 = vld [vmem:[%s300 + $0x50] sm:$0xff]
        %v387 = vld [vmem:[%s300 + $0x58] sm:$0xff]
        %v388 = vld [vmem:[%s300 + $0x60] sm:$0xff]
        %v389 = vld [vmem:[%s300 + $0x68] sm:$0xff]
        %v390 = vld [vmem:[%s300 + $0x70] sm:$0xff]
        %v391 = vld [vmem:[%s300 + $0x78] sm:$0xff]
        %v392 = vld [vmem:[%s300 + $0x80] sm:$0xff]
        %v393 = vld [vmem:[%s300 + $0x88] sm:$0xff]
        %v394 = vld [vmem:[%s300 + $0x90] sm:$0xff]
        %v395 = vld [vmem:[%s300 + $0x98] sm:$0xff]
        %v396 = vld [vmem:[%s300 + $0xa0] sm:$0xff]
        %v397 = vld [vmem:[%s300 + $0xa8] sm:$0xff]
        %v398 = vld [vmem:[%s300 + $0xb0] sm:$0xff]
        %v399 = vld [vmem:[%s300 + $0xb8] sm:$0xff]
        %v400 = vld [vmem:[%s300 + $0xc0] sm:$0xff]
        %v401 = vld [vmem:[%s300 + $0xc8] sm:$0xff]
        %v402 = vld [vmem:[%s300 + $0xd0] sm:$0xff]
        %v403 = vld [vmem:[%s300 + $0xd8] sm:$0xff]
        %v404 = vld [vmem:[%s300 + $0xe0] sm:$0xff]
        %v405 = vld [vmem:[%s300 + $0xe8] sm:$0xff]
        %v406 = vld [vmem:[%s300 + $0xf0] sm:$0xff]
        %v407 = vld [vmem:[%s300 + $0xf8] sm:$0xff]
        %v408 = vld [vmem:[%s300 + $0x100] sm:$0xff]
        %v409 = vld [vmem:[%s300 + $0x108] sm:$0xff]
        %v410 = vld [vmem:[%s300 + $0x110] sm:$0xff]
        %v411 = vld [vmem:[%s300 + $0x118] sm:$0xff]
        %v412 = vld [vmem:[%s300 + $0x120] sm:$0xff]
        %v413 = vld [vmem:[%s300 + $0x128] sm:$0xff]
        %v414 = vld [vmem:[%s300 + $0x130] sm:$0xff]
        %v415 = vld [vmem:[%s300 + $0x138] sm:$0xff]
        %v416 = vld [vmem:[%s300 + $0x140] sm:$0xff]
        %v417 = vld [vmem:[%s300 + $0x148] sm:$0xff]
        %v418 = vld [vmem:[%s300 + $0x150] sm:$0xff]
        %v419 = vld [vmem:[%s300 + $0x158] sm:$0xff]
        %v420 = vld [vmem:[%s300 + $0x160] sm:$0xff]
        %v421 = vld [vmem:[%s300 + $0x168] sm:$0xff]
        %v422 = vld [vmem:[%s300 + $0x170] sm:$0xff]
        %v423 = vld [vmem:[%s300 + $0x178] sm:$0xff]
        %v424 = vld [vmem:[%s300 + $0x180] sm:$0xff]
        %v425 = vld [vmem:[%s300 + $0x188] sm:$0xff]
        %v426 = vld [vmem:[%s300 + $0x190] sm:$0xff]
        %v427 = vld [vmem:[%s300 + $0x198] sm:$0xff]
        %v428 = vld [vmem:[%s300 + $0x1a0] sm:$0xff]
        %v429 = vld [vmem:[%s300 + $0x1a8] sm:$0xff]
        %v430 = vld [vmem:[%s300 + $0x1b0] sm:$0xff]
        %v431 = vld [vmem:[%s300 + $0x1b8] sm:$0xff]
        %v432 = vld [vmem:[%s300 + $0x1c0] sm:$0xff]
        %v433 = vld [vmem:[%s300 + $0x1c8] sm:$0xff]
        %v434 = vld [vmem:[%s300 + $0x1d0] sm:$0xff]
        %v435 = vld [vmem:[%s300 + $0x1d8] sm:$0xff]
        %v436 = vld [vmem:[%s300 + $0x1e0] sm:$0xff]
        %v437 = vld [vmem:[%s300 + $0x1e8] sm:$0xff]
        %v438 = vld [vmem:[%s300 + $0x1f0] sm:$0xff]
        %v439 = vld [vmem:[%s300 + $0x1f8] sm:$0xff]
        %v440 = vld [vmem:[%s300 + $0x200] sm:$0xff]
        %v441 = vld [vmem:[%s300 + $0x208] sm:$0xff]
        %v442 = vld [vmem:[%s300 + $0x210] sm:$0xff]
        %v443 = vld [vmem:[%s300 + $0x218] sm:$0xff]
        %v444 = vld [vmem:[%s300 + $0x220] sm:$0xff]
        %v445 = vld [vmem:[%s300 + $0x228] sm:$0xff]
        %v446 = vld [vmem:[%s300 + $0x230] sm:$0xff]
        %v447 = vld [vmem:[%s300 + $0x238] sm:$0xff]
        %v448 = vld [vmem:[%s300 + $0x240] sm:$0xff]
        %v449 = vld [vmem:[%s300 + $0x248] sm:$0xff]
        %v450 = vld [vmem:[%s300 + $0x250] sm:$0xff]
        %v451 = vld [vmem:[%s300 + $0x258] sm:$0xff]
        %v452 = vld [vmem:[%s300 + $0x260] sm:$0xff]
        %v453 = vld [vmem:[%s300 + $0x268] sm:$0xff]
        %v454 = vld [vmem:[%s300 + $0x270] sm:$0xff]
        %v455 = vld [vmem:[%s300 + $0x278] sm:$0xff]
        %v456 = vld [vmem:[%s300 + $0x280] sm:$0xff]
        %v457 = vld [vmem:[%s300 + $0x288] sm:$0xff]
        %v458 = vld [vmem:[%s300 + $0x290] sm:$0xff]
        %v459 = vld [vmem:[%s300 + $0x298] sm:$0xff]
        %v460 = vld [vmem:[%s300 + $0x2a0] sm:$0xff]
        %v461 = vld [vmem:[%s300 + $0x2a8] sm:$0xff]
        %v462 = vld [vmem:[%s300 + $0x2b0] sm:$0xff]
        %v463 = vld [vmem:[%s300 + $0x2b8] sm:$0xff]
        %v464 = vld [vmem:[%s300 + $0x2c0] sm:$0xff]
        %v465 = vld [vmem:[%s300 + $0x2c8] sm:$0xff]
        %v466 = vld [vmem:[%s300 + $0x2d0] sm:$0xff]
        %v467 = vld [vmem:[%s300 + $0x2d8] sm:$0xff]
        %v468 = vld [vmem:[%s300 + $0x2e0] sm:$0xff]
        %v469 = vld [vmem:[%s300 + $0x2e8] sm:$0xff]
        %v470 = vld [vmem:[%s300 + $0x2f0] sm:$0xff]
        %v471 = vld [vmem:[%s300 + $0x2f8] sm:$0xff]
        %v568 = vunpack.c.l.b16 %v376
        %v569 = vunpack.c.h.b16 %v376
        %v570 = vunpack.c.l.b16 %v377
        %v571 = vunpack.c.h.b16 %v377
        %v572 = vunpack.c.l.b16 %v378
        %v573 = vunpack.c.h.b16 %v378
        %v574 = vunpack.c.l.b16 %v379
        %v575 = vunpack.c.h.b16 %v379
        %v576 = vunpack.c.l.b16 %v380
        %v577 = vunpack.c.h.b16 %v380
        %v578 = vunpack.c.l.b16 %v381
        %v579 = vunpack.c.h.b16 %v381
        %v580 = vunpack.c.l.b16 %v382
        %v581 = vunpack.c.h.b16 %v382
        %v582 = vunpack.c.l.b16 %v383
        %v583 = vunpack.c.h.b16 %v383
        %v584 = vunpack.c.l.b16 %v384
        %v585 = vunpack.c.h.b16 %v384
        %v586 = vunpack.c.l.b16 %v385
        %v587 = vunpack.c.h.b16 %v385
        %v588 = vunpack.c.l.b16 %v386
        %v589 = vunpack.c.h.b16 %v386
        %v590 = vunpack.c.l.b16 %v387
        %v591 = vunpack.c.h.b16 %v387
        %v592 = vunpack.c.l.b16 %v388
        %v593 = vunpack.c.h.b16 %v388
        %v594 = vunpack.c.l.b16 %v389
        %v595 = vunpack.c.h.b16 %v389
        %v596 = vunpack.c.l.b16 %v390
        %v597 = vunpack.c.h.b16 %v390
        %v598 = vunpack.c.l.b16 %v391
        %v599 = vunpack.c.h.b16 %v391
        %v600 = vunpack.c.l.b16 %v392
        %v601 = vunpack.c.h.b16 %v392
        %v602 = vunpack.c.l.b16 %v393
        %v603 = vunpack.c.h.b16 %v393
        %v604 = vunpack.c.l.b16 %v394
        %v605 = vunpack.c.h.b16 %v394
        %v606 = vunpack.c.l.b16 %v395
        %v607 = vunpack.c.h.b16 %v395
        %v608 = vunpack.c.l.b16 %v396
        %v609 = vunpack.c.h.b16 %v396
        %v610 = vunpack.c.l.b16 %v397
        %v611 = vunpack.c.h.b16 %v397
        %v612 = vunpack.c.l.b16 %v398
        %v613 = vunpack.c.h.b16 %v398
        %v614 = vunpack.c.l.b16 %v399
        %v615 = vunpack.c.h.b16 %v399
        %v616 = vunpack.c.l.b16 %v400
        %v617 = vunpack.c.h.b16 %v400
        %v618 = vunpack.c.l.b16 %v401
        %v619 = vunpack.c.h.b16 %v401
        %v620 = vunpack.c.l.b16 %v402
        %v621 = vunpack.c.h.b16 %v402
        %v622 = vunpack.c.l.b16 %v403
        %v623 = vunpack.c.h.b16 %v403
        %v624 = vunpack.c.l.b16 %v404
        %v625 = vunpack.c.h.b16 %v404
        %v626 = vunpack.c.l.b16 %v405
        %v627 = vunpack.c.h.b16 %v405
        %v628 = vunpack.c.l.b16 %v406
        %v629 = vunpack.c.h.b16 %v406
        %v630 = vunpack.c.l.b16 %v407
        %v631 = vunpack.c.h.b16 %v407
        %v632 = vunpack.c.l.b16 %v408
        %v633 = vunpack.c.h.b16 %v408
        %v634 = vunpack.c.l.b16 %v409
        %v635 = vunpack.c.h.b16 %v409
        %v636 = vunpack.c.l.b16 %v410
        %v637 = vunpack.c.h.b16 %v410
        %v638 = vunpack.c.l.b16 %v411
        %v639 = vunpack.c.h.b16 %v411
        %v640 = vunpack.c.l.b16 %v412
        %v641 = vunpack.c.h.b16 %v412
        %v642 = vunpack.c.l.b16 %v413
        %v643 = vunpack.c.h.b16 %v413
        %v644 = vunpack.c.l.b16 %v414
        %v645 = vunpack.c.h.b16 %v414
        %v646 = vunpack.c.l.b16 %v415
        %v647 = vunpack.c.h.b16 %v415
        %v648 = vunpack.c.l.b16 %v416
        %v649 = vunpack.c.h.b16 %v416
        %v650 = vunpack.c.l.b16 %v417
        %v651 = vunpack.c.h.b16 %v417
        %v652 = vunpack.c.l.b16 %v418
        %v653 = vunpack.c.h.b16 %v418
        %v654 = vunpack.c.l.b16 %v419
        %v655 = vunpack.c.h.b16 %v419
        %v656 = vunpack.c.l.b16 %v420
        %v657 = vunpack.c.h.b16 %v420
        %v658 = vunpack.c.l.b16 %v421
        %v659 = vunpack.c.h.b16 %v421
        %v660 = vunpack.c.l.b16 %v422
        %v661 = vunpack.c.h.b16 %v422
        %v662 = vunpack.c.l.b16 %v423
        %v663 = vunpack.c.h.b16 %v423
        %v664 = vunpack.c.l.b16 %v424
        %v665 = vunpack.c.h.b16 %v424
        %v666 = vunpack.c.l.b16 %v425
        %v667 = vunpack.c.h.b16 %v425
        %v668 = vunpack.c.l.b16 %v426
        %v669 = vunpack.c.h.b16 %v426
        %v670 = vunpack.c.l.b16 %v427
        %v671 = vunpack.c.h.b16 %v427
        %v672 = vunpack.c.l.b16 %v428
        %v673 = vunpack.c.h.b16 %v428
        %v674 = vunpack.c.l.b16 %v429
        %v675 = vunpack.c.h.b16 %v429
        %v676 = vunpack.c.l.b16 %v430
        %v677 = vunpack.c.h.b16 %v430
        %v678 = vunpack.c.l.b16 %v431
        %v679 = vunpack.c.h.b16 %v431
        %v680 = vunpack.c.l.b16 %v432
        %v681 = vunpack.c.h.b16 %v432
        %v682 = vunpack.c.l.b16 %v433
        %v683 = vunpack.c.h.b16 %v433
        %v684 = vunpack.c.l.b16 %v434
        %v685 = vunpack.c.h.b16 %v434
        %v686 = vunpack.c.l.b16 %v435
        %v687 = vunpack.c.h.b16 %v435
        %v688 = vunpack.c.l.b16 %v436
        %v689 = vunpack.c.h.b16 %v436
        %v690 = vunpack.c.l.b16 %v437
        %v691 = vunpack.c.h.b16 %v437
        %v692 = vunpack.c.l.b16 %v438
        %v693 = vunpack.c.h.b16 %v438
        %v694 = vunpack.c.l.b16 %v439
        %v695 = vunpack.c.h.b16 %v439
        %v696 = vunpack.c.l.b16 %v440
        %v697 = vunpack.c.h.b16 %v440
        %v698 = vunpack.c.l.b16 %v441
        %v699 = vunpack.c.h.b16 %v441
        %v700 = vunpack.c.l.b16 %v442
        %v701 = vunpack.c.h.b16 %v442
        %v702 = vunpack.c.l.b16 %v443
        %v703 = vunpack.c.h.b16 %v443
        %v704 = vunpack.c.l.b16 %v444
        %v705 = vunpack.c.h.b16 %v444
        %v706 = vunpack.c.l.b16 %v445
        %v707 = vunpack.c.h.b16 %v445
        %v708 = vunpack.c.l.b16 %v446
        %v709 = vunpack.c.h.b16 %v446
        %v710 = vunpack.c.l.b16 %v447
        %v711 = vunpack.c.h.b16 %v447
        %v712 = vunpack.c.l.b16 %v448
        %v713 = vunpack.c.h.b16 %v448
        %v714 = vunpack.c.l.b16 %v449
        %v715 = vunpack.c.h.b16 %v449
        %v716 = vunpack.c.l.b16 %v450
        %v717 = vunpack.c.h.b16 %v450
        %v718 = vunpack.c.l.b16 %v451
        %v719 = vunpack.c.h.b16 %v451
        %v720 = vunpack.c.l.b16 %v452
        %v721 = vunpack.c.h.b16 %v452
        %v722 = vunpack.c.l.b16 %v453
        %v723 = vunpack.c.h.b16 %v453
        %v724 = vunpack.c.l.b16 %v454
        %v725 = vunpack.c.h.b16 %v454
        %v726 = vunpack.c.l.b16 %v455
        %v727 = vunpack.c.h.b16 %v455
        %v728 = vunpack.c.l.b16 %v456
        %v729 = vunpack.c.h.b16 %v456
        %v730 = vunpack.c.l.b16 %v457
        %v731 = vunpack.c.h.b16 %v457
        %v732 = vunpack.c.l.b16 %v458
        %v733 = vunpack.c.h.b16 %v458
        %v734 = vunpack.c.l.b16 %v459
        %v735 = vunpack.c.h.b16 %v459
        %v736 = vunpack.c.l.b16 %v460
        %v737 = vunpack.c.h.b16 %v460
        %v738 = vunpack.c.l.b16 %v461
        %v739 = vunpack.c.h.b16 %v461
        %v740 = vunpack.c.l.b16 %v462
        %v741 = vunpack.c.h.b16 %v462
        %v742 = vunpack.c.l.b16 %v463
        %v743 = vunpack.c.h.b16 %v463
        %v744 = vunpack.c.l.b16 %v464
        %v745 = vunpack.c.h.b16 %v464
        %v746 = vunpack.c.l.b16 %v465
        %v747 = vunpack.c.h.b16 %v465
        %v748 = vunpack.c.l.b16 %v466
        %v749 = vunpack.c.h.b16 %v466
        %v750 = vunpack.c.l.b16 %v467
        %v751 = vunpack.c.h.b16 %v467
        %v752 = vunpack.c.l.b16 %v468
        %v753 = vunpack.c.h.b16 %v468
        %v754 = vunpack.c.l.b16 %v469
        %v755 = vunpack.c.h.b16 %v469
        %v756 = vunpack.c.l.b16 %v470
        %v757 = vunpack.c.h.b16 %v470
        %v758 = vunpack.c.l.b16 %v471
        %v759 = vunpack.c.h.b16 %v471
        %v760 = vpack.c.b16 %v572, %v568
        %v761 = vpack.c.b16 %v573, %v569
        %v762 = vpack.c.b16 %v574, %v570
        %v763 = vpack.c.b16 %v575, %v571
        %v764 = vpack.c.b16 %v580, %v576
        %v765 = vpack.c.b16 %v581, %v577
        %v766 = vpack.c.b16 %v582, %v578
        %v767 = vpack.c.b16 %v583, %v579
        %v768 = vpack.c.b16 %v588, %v584
        %v769 = vpack.c.b16 %v589, %v585
        %v770 = vpack.c.b16 %v590, %v586
        %v771 = vpack.c.b16 %v591, %v587
        %v772 = vpack.c.b16 %v596, %v592
        %v773 = vpack.c.b16 %v597, %v593
        %v774 = vpack.c.b16 %v598, %v594
        %v775 = vpack.c.b16 %v599, %v595
        %v776 = vpack.c.b16 %v604, %v600
        %v777 = vpack.c.b16 %v605, %v601
        %v778 = vpack.c.b16 %v606, %v602
        %v779 = vpack.c.b16 %v607, %v603
        %v780 = vpack.c.b16 %v612, %v608
        %v781 = vpack.c.b16 %v613, %v609
        %v782 = vpack.c.b16 %v614, %v610
        %v783 = vpack.c.b16 %v615, %v611
        %v784 = vpack.c.b16 %v620, %v616
        %v785 = vpack.c.b16 %v621, %v617
        %v786 = vpack.c.b16 %v622, %v618
        %v787 = vpack.c.b16 %v623, %v619
        %v788 = vpack.c.b16 %v628, %v624
        %v789 = vpack.c.b16 %v629, %v625
        %v790 = vpack.c.b16 %v630, %v626
        %v791 = vpack.c.b16 %v631, %v627
        %v792 = vpack.c.b16 %v636, %v632
        %v793 = vpack.c.b16 %v637, %v633
        %v794 = vpack.c.b16 %v638, %v634
        %v795 = vpack.c.b16 %v639, %v635
        %v796 = vpack.c.b16 %v644, %v640
        %v797 = vpack.c.b16 %v645, %v641
        %v798 = vpack.c.b16 %v646, %v642
        %v799 = vpack.c.b16 %v647, %v643
        %v800 = vpack.c.b16 %v652, %v648
        %v801 = vpack.c.b16 %v653, %v649
        %v802 = vpack.c.b16 %v654, %v650
        %v803 = vpack.c.b16 %v655, %v651
        %v804 = vpack.c.b16 %v660, %v656
        %v805 = vpack.c.b16 %v661, %v657
        %v806 = vpack.c.b16 %v662, %v658
        %v807 = vpack.c.b16 %v663, %v659
        %v808 = vpack.c.b16 %v668, %v664
        %v809 = vpack.c.b16 %v669, %v665
        %v810 = vpack.c.b16 %v670, %v666
        %v811 = vpack.c.b16 %v671, %v667
        %v812 = vpack.c.b16 %v676, %v672
        %v813 = vpack.c.b16 %v677, %v673
        %v814 = vpack.c.b16 %v678, %v674
        %v815 = vpack.c.b16 %v679, %v675
        %v816 = vpack.c.b16 %v684, %v680
        %v817 = vpack.c.b16 %v685, %v681
        %v818 = vpack.c.b16 %v686, %v682
        %v819 = vpack.c.b16 %v687, %v683
        %v820 = vpack.c.b16 %v692, %v688
        %v821 = vpack.c.b16 %v693, %v689
        %v822 = vpack.c.b16 %v694, %v690
        %v823 = vpack.c.b16 %v695, %v691
        %v824 = vpack.c.b16 %v700, %v696
        %v825 = vpack.c.b16 %v701, %v697
        %v826 = vpack.c.b16 %v702, %v698
        %v827 = vpack.c.b16 %v703, %v699
        %v828 = vpack.c.b16 %v708, %v704
        %v829 = vpack.c.b16 %v709, %v705
        %v830 = vpack.c.b16 %v710, %v706
        %v831 = vpack.c.b16 %v711, %v707
        %v832 = vpack.c.b16 %v716, %v712
        %v833 = vpack.c.b16 %v717, %v713
        %v834 = vpack.c.b16 %v718, %v714
        %v835 = vpack.c.b16 %v719, %v715
        %v836 = vpack.c.b16 %v724, %v720
        %v837 = vpack.c.b16 %v725, %v721
        %v838 = vpack.c.b16 %v726, %v722
        %v839 = vpack.c.b16 %v727, %v723
        %v840 = vpack.c.b16 %v732, %v728
        %v841 = vpack.c.b16 %v733, %v729
        %v842 = vpack.c.b16 %v734, %v730
        %v843 = vpack.c.b16 %v735, %v731
        %v844 = vpack.c.b16 %v740, %v736
        %v845 = vpack.c.b16 %v741, %v737
        %v846 = vpack.c.b16 %v742, %v738
        %v847 = vpack.c.b16 %v743, %v739
        %v848 = vpack.c.b16 %v748, %v744
        %v849 = vpack.c.b16 %v749, %v745
        %v850 = vpack.c.b16 %v750, %v746
        %v851 = vpack.c.b16 %v751, %v747
        %v852 = vpack.c.b16 %v756, %v752
        %v853 = vpack.c.b16 %v757, %v753
        %v854 = vpack.c.b16 %v758, %v754
        %v855 = vpack.c.b16 %v759, %v755
        %952 = vmatpush.bf16.msra.mxu0 %v788
        %953 = vmatpush.bf16.msra.mxu0 %v784
        %954 = vmatpush.bf16.msra.mxu0 %v780
        %955 = vmatpush.bf16.msra.mxu0 %v776
        %956 = vmatpush.bf16.msra.mxu0 %v772
        %957 = vmatpush.bf16.msra.mxu0 %v768
        %958 = vmatpush.bf16.msra.mxu0 %v764
        %959 = vmatpush.bf16.msra.mxu0 %v760
        %960 = vmatmul.bf16.gmra.mxu0 %v373
        %v961 = vpop.f32.mrf.mxu0
        %v962 = vadd.f32 0.0, %v961
        %v963 = vpop.f32.mrf.mxu0
        %v964 = vadd.f32 0.0, %v963
        %965 = vdwg.mxu0
        %966 = vmatpush.bf16.msra.mxu0 %v820
        %967 = vmatpush.bf16.msra.mxu0 %v816
        %968 = vmatpush.bf16.msra.mxu0 %v812
        %969 = vmatpush.bf16.msra.mxu0 %v808
        %970 = vmatpush.bf16.msra.mxu0 %v804
        %971 = vmatpush.bf16.msra.mxu0 %v800
        %972 = vmatpush.bf16.msra.mxu0 %v796
        %973 = vmatpush.bf16.msra.mxu0 %v792
        %974 = vmatmul.bf16.gmra.mxu0 %v374
        %v975 = vpop.f32.mrf.mxu0
        %v976 = vadd.f32 %v962, %v975
        %v977 = vpop.f32.mrf.mxu0
        %v978 = vadd.f32 %v964, %v977
        %979 = vdwg.mxu0
        %980 = vmatpush.bf16.msra.mxu0 %v852
        %981 = vmatpush.bf16.msra.mxu0 %v848
        %982 = vmatpush.bf16.msra.mxu0 %v844
        %983 = vmatpush.bf16.msra.mxu0 %v840
        %984 = vmatpush.bf16.msra.mxu0 %v836
        %985 = vmatpush.bf16.msra.mxu0 %v832
        %986 = vmatpush.bf16.msra.mxu0 %v828
        %987 = vmatpush.bf16.msra.mxu0 %v824
        %988 = vmatmul.bf16.gmra.mxu0 %v375
        %v989 = vpop.f32.mrf.mxu0
        %v990 = vadd.f32 %v976, %v989
        %v991 = vpop.f32.mrf.mxu0
        %v992 = vadd.f32 %v978, %v991
        %993 = vdwg.mxu0
        %994 = vmatpush.bf16.msra.mxu0 %v789
        %995 = vmatpush.bf16.msra.mxu0 %v785
        %996 = vmatpush.bf16.msra.mxu0 %v781
        %997 = vmatpush.bf16.msra.mxu0 %v777
        %998 = vmatpush.bf16.msra.mxu0 %v773
        %999 = vmatpush.bf16.msra.mxu0 %v769
        %1000 = vmatpush.bf16.msra.mxu0 %v765
        %1001 = vmatpush.bf16.msra.mxu0 %v761
        %1002 = vmatmul.bf16.gmra.mxu0 %v373
        %v1003 = vpop.f32.mrf.mxu0
        %v1004 = vadd.f32 0.0, %v1003
        %v1005 = vpop.f32.mrf.mxu0
        %v1006 = vadd.f32 0.0, %v1005
        %1007 = vdwg.mxu0
        %1008 = vmatpush.bf16.msra.mxu0 %v821
        %1009 = vmatpush.bf16.msra.mxu0 %v817
        %1010 = vmatpush.bf16.msra.mxu0 %v813
        %1011 = vmatpush.bf16.msra.mxu0 %v809
        %1012 = vmatpush.bf16.msra.mxu0 %v805
        %1013 = vmatpush.bf16.msra.mxu0 %v801
        %1014 = vmatpush.bf16.msra.mxu0 %v797
        %1015 = vmatpush.bf16.msra.mxu0 %v793
        %1016 = vmatmul.bf16.gmra.mxu0 %v374
        %v1017 = vpop.f32.mrf.mxu0
        %v1018 = vadd.f32 %v1004, %v1017
        %v1019 = vpop.f32.mrf.mxu0
        %v1020 = vadd.f32 %v1006, %v1019
        %1021 = vdwg.mxu0
        %1022 = vmatpush.bf16.msra.mxu0 %v853
        %1023 = vmatpush.bf16.msra.mxu0 %v849
        %1024 = vmatpush.bf16.msra.mxu0 %v845
        %1025 = vmatpush.bf16.msra.mxu0 %v841
        %1026 = vmatpush.bf16.msra.mxu0 %v837
        %1027 = vmatpush.bf16.msra.mxu0 %v833
        %1028 = vmatpush.bf16.msra.mxu0 %v829
        %1029 = vmatpush.bf16.msra.mxu0 %v825
        %1030 = vmatmul.bf16.gmra.mxu0 %v375
        %v1031 = vpop.f32.mrf.mxu0
        %v1032 = vadd.f32 %v1018, %v1031
        %v1033 = vpop.f32.mrf.mxu0
        %v1034 = vadd.f32 %v1020, %v1033
        %1035 = vdwg.mxu0
        %1036 = vmatpush.bf16.msra.mxu0 %v790
        %1037 = vmatpush.bf16.msra.mxu0 %v786
        %1038 = vmatpush.bf16.msra.mxu0 %v782
        %1039 = vmatpush.bf16.msra.mxu0 %v778
        %1040 = vmatpush.bf16.msra.mxu0 %v774
        %1041 = vmatpush.bf16.msra.mxu0 %v770
        %1042 = vmatpush.bf16.msra.mxu0 %v766
        %1043 = vmatpush.bf16.msra.mxu0 %v762
        %1044 = vmatmul.bf16.gmra.mxu0 %v373
        %v1045 = vpop.f32.mrf.mxu0
        %v1046 = vadd.f32 0.0, %v1045
        %v1047 = vpop.f32.mrf.mxu0
        %v1048 = vadd.f32 0.0, %v1047
        %1049 = vdwg.mxu0
        %1050 = vmatpush.bf16.msra.mxu0 %v822
        %1051 = vmatpush.bf16.msra.mxu0 %v818
        %1052 = vmatpush.bf16.msra.mxu0 %v814
        %1053 = vmatpush.bf16.msra.mxu0 %v810
        %1054 = vmatpush.bf16.msra.mxu0 %v806
        %1055 = vmatpush.bf16.msra.mxu0 %v802
        %1056 = vmatpush.bf16.msra.mxu0 %v798
        %1057 = vmatpush.bf16.msra.mxu0 %v794
        %1058 = vmatmul.bf16.gmra.mxu0 %v374
        %v1059 = vpop.f32.mrf.mxu0
        %v1060 = vadd.f32 %v1046, %v1059
        %v1061 = vpop.f32.mrf.mxu0
        %v1062 = vadd.f32 %v1048, %v1061
        %1063 = vdwg.mxu0
        %1064 = vmatpush.bf16.msra.mxu0 %v854
        %1065 = vmatpush.bf16.msra.mxu0 %v850
        %1066 = vmatpush.bf16.msra.mxu0 %v846
        %1067 = vmatpush.bf16.msra.mxu0 %v842
        %1068 = vmatpush.bf16.msra.mxu0 %v838
        %1069 = vmatpush.bf16.msra.mxu0 %v834
        %1070 = vmatpush.bf16.msra.mxu0 %v830
        %1071 = vmatpush.bf16.msra.mxu0 %v826
        %1072 = vmatmul.bf16.gmra.mxu0 %v375
        %v1073 = vpop.f32.mrf.mxu0
        %v1074 = vadd.f32 %v1060, %v1073
        %v1075 = vpop.f32.mrf.mxu0
        %v1076 = vadd.f32 %v1062, %v1075
        %1077 = vdwg.mxu0
        %1078 = vmatpush.bf16.msra.mxu0 %v791
        %1079 = vmatpush.bf16.msra.mxu0 %v787
        %1080 = vmatpush.bf16.msra.mxu0 %v783
        %1081 = vmatpush.bf16.msra.mxu0 %v779
        %1082 = vmatpush.bf16.msra.mxu0 %v775
        %1083 = vmatpush.bf16.msra.mxu0 %v771
        %1084 = vmatpush.bf16.msra.mxu0 %v767
        %1085 = vmatpush.bf16.msra.mxu0 %v763
        %1086 = vmatmul.bf16.gmra.mxu0 %v373
        %v1087 = vpop.f32.mrf.mxu0
        %v1088 = vadd.f32 0.0, %v1087
        %v1089 = vpop.f32.mrf.mxu0
        %v1090 = vadd.f32 0.0, %v1089
        %1091 = vdwg.mxu0
        %1092 = vmatpush.bf16.msra.mxu0 %v823
        %1093 = vmatpush.bf16.msra.mxu0 %v819
        %1094 = vmatpush.bf16.msra.mxu0 %v815
        %1095 = vmatpush.bf16.msra.mxu0 %v811
        %1096 = vmatpush.bf16.msra.mxu0 %v807
        %1097 = vmatpush.bf16.msra.mxu0 %v803
        %1098 = vmatpush.bf16.msra.mxu0 %v799
        %1099 = vmatpush.bf16.msra.mxu0 %v795
        %1100 = vmatmul.bf16.gmra.mxu0 %v374
        %v1101 = vpop.f32.mrf.mxu0
        %v1102 = vadd.f32 %v1088, %v1101
        %v1103 = vpop.f32.mrf.mxu0
        %v1104 = vadd.f32 %v1090, %v1103
        %1105 = vdwg.mxu0
        %1106 = vmatpush.bf16.msra.mxu0 %v855
        %1107 = vmatpush.bf16.msra.mxu0 %v851
        %1108 = vmatpush.bf16.msra.mxu0 %v847
        %1109 = vmatpush.bf16.msra.mxu0 %v843
        %1110 = vmatpush.bf16.msra.mxu0 %v839
        %1111 = vmatpush.bf16.msra.mxu0 %v835
        %1112 = vmatpush.bf16.msra.mxu0 %v831
        %1113 = vmatpush.bf16.msra.mxu0 %v827
        %1114 = vmatmul.bf16.gmra.mxu0 %v375
        %v1115 = vpop.f32.mrf.mxu0
        %v1116 = vadd.f32 %v1102, %v1115
        %v1117 = vpop.f32.mrf.mxu0
        %v1118 = vadd.f32 %v1104, %v1117
        %1119 = vdwg.mxu0
        %v1120 = vadd.f32 %v359, %v990
        %v1121 = vadd.f32 %v360, %v1032
        %v1122 = vadd.f32 %v361, %v1074
        %v1123 = vadd.f32 %v362, %v1116
        %v1124 = vadd.f32 %v363, %v992
        %v1125 = vadd.f32 %v364, %v1034
        %v1126 = vadd.f32 %v365, %v1076
        %v1127 = vadd.f32 %v366, %v1118
        %1128 = vst [vmem:[#allocation2] sm:$0xff] %v1120
        %1129 = vst [vmem:[#allocation2 + $0x8] sm:$0xff] %v1121
        %1130 = vst [vmem:[#allocation2 + $0x10] sm:$0xff] %v1122
        %1131 = vst [vmem:[#allocation2 + $0x18] sm:$0xff] %v1123
        %1132 = vst [vmem:[#allocation2 + $0x20] sm:$0xff] %v1124
        %1133 = vst [vmem:[#allocation2 + $0x28] sm:$0xff] %v1125
        %1134 = vst [vmem:[#allocation2 + $0x30] sm:$0xff] %v1126
        %1135 = vst [vmem:[#allocation2 + $0x38] sm:$0xff] %v1127
        %p1136 = scmp.eq.s32.totalorder %s29, 1
        // Predicated region
        $region65: #{tpu_custom_call.1} parent=39 // pred_check
          %p1137 = pneg %p1136
        $region66: #{tpu_custom_call.1} parent=39 // pred_check_branch
          %1139 = sbr.rel (%p1137) target = $region68
        $region67: #{tpu_custom_call.1} parent=39 // pred_region
          %v1140 = vld [vmem:[#allocation2] sm:$0xff]
          %v1141 = vld [vmem:[#allocation2 + $0x8] sm:$0xff]
          %v1142 = vld [vmem:[#allocation2 + $0x10] sm:$0xff]
          %v1143 = vld [vmem:[#allocation2 + $0x18] sm:$0xff]
          %v1144 = vld [vmem:[#allocation2 + $0x20] sm:$0xff]
          %v1145 = vld [vmem:[#allocation2 + $0x28] sm:$0xff]
          %v1146 = vld [vmem:[#allocation2 + $0x30] sm:$0xff]
          %v1147 = vld [vmem:[#allocation2 + $0x38] sm:$0xff]
          %v1148 = vld [vmem:[#allocation8] sm:$0xf]
          %v1150 = vperm.slane %v1148, 0
          %v1151 = vperm.slane %v1148, 1
          %v1152 = vperm.slane %v1148, 2
          %v1153 = vperm.slane %v1148, 3
          %v1158 = vadd.f32 %v1140, %v1150
          %v1159 = vadd.f32 %v1141, %v1151
          %v1160 = vadd.f32 %v1142, %v1152
          %v1161 = vadd.f32 %v1143, %v1153
          %v1162 = vadd.f32 %v1144, %v1150
          %v1163 = vadd.f32 %v1145, %v1151
          %v1164 = vadd.f32 %v1146, %v1152
          %v1165 = vadd.f32 %v1147, %v1153
          %v1166 = vpack.c.bf16 %v1162, %v1158
          %v1167 = vpack.c.bf16 %v1163, %v1159
          %v1168 = vpack.c.bf16 %v1164, %v1160
          %v1169 = vpack.c.bf16 %v1165, %v1161
          %v1170 = vld [vmem:[#allocation9] sm:$0xff]
          %v1171 = vld [vmem:[#allocation9 + $0x8] sm:$0xff]
          %v1172 = vld [vmem:[#allocation9 + $0x10] sm:$0xff]
          %v1173 = vld [vmem:[#allocation9 + $0x18] sm:$0xff]
          %v1174 = vld [vmem:[#allocation9 + $0x20] sm:$0xff]
          %v1175 = vld [vmem:[#allocation9 + $0x28] sm:$0xff]
          %v1176 = vld [vmem:[#allocation9 + $0x30] sm:$0xff]
          %v1177 = vld [vmem:[#allocation9 + $0x38] sm:$0xff]
          %v1178 = vld [vmem:[#allocation9 + $0x40] sm:$0xff]
          %v1179 = vld [vmem:[#allocation9 + $0x48] sm:$0xff]
          %v1180 = vld [vmem:[#allocation9 + $0x50] sm:$0xff]
          %v1181 = vld [vmem:[#allocation9 + $0x58] sm:$0xff]
          %v1182 = vld [vmem:[#allocation9 + $0x60] sm:$0xff]
          %v1183 = vld [vmem:[#allocation9 + $0x68] sm:$0xff]
          %v1184 = vld [vmem:[#allocation9 + $0x70] sm:$0xff]
          %v1185 = vld [vmem:[#allocation9 + $0x78] sm:$0xff]
          %v1186 = vld [vmem:[#allocation9 + $0x80] sm:$0xff]
          %v1187 = vld [vmem:[#allocation9 + $0x88] sm:$0xff]
          %v1188 = vld [vmem:[#allocation9 + $0x90] sm:$0xff]
          %v1189 = vld [vmem:[#allocation9 + $0x98] sm:$0xff]
          %v1190 = vld [vmem:[#allocation9 + $0xa0] sm:$0xff]
          %v1191 = vld [vmem:[#allocation9 + $0xa8] sm:$0xff]
          %v1192 = vld [vmem:[#allocation9 + $0xb0] sm:$0xff]
          %v1193 = vld [vmem:[#allocation9 + $0xb8] sm:$0xff]
          %v1194 = vld [vmem:[#allocation9 + $0xc0] sm:$0xff]
          %v1195 = vld [vmem:[#allocation9 + $0xc8] sm:$0xff]
          %v1196 = vld [vmem:[#allocation9 + $0xd0] sm:$0xff]
          %v1197 = vld [vmem:[#allocation9 + $0xd8] sm:$0xff]
          %v1198 = vld [vmem:[#allocation9 + $0xe0] sm:$0xff]
          %v1199 = vld [vmem:[#allocation9 + $0xe8] sm:$0xff]
          %v1200 = vld [vmem:[#allocation9 + $0xf0] sm:$0xff]
          %v1201 = vld [vmem:[#allocation9 + $0xf8] sm:$0xff]
          %v1202 = vld [vmem:[#allocation9 + $0x100] sm:$0xff]
          %v1203 = vld [vmem:[#allocation9 + $0x108] sm:$0xff]
          %v1204 = vld [vmem:[#allocation9 + $0x110] sm:$0xff]
          %v1205 = vld [vmem:[#allocation9 + $0x118] sm:$0xff]
          %v1206 = vld [vmem:[#allocation9 + $0x120] sm:$0xff]
          %v1207 = vld [vmem:[#allocation9 + $0x128] sm:$0xff]
          %v1208 = vld [vmem:[#allocation9 + $0x130] sm:$0xff]
          %v1209 = vld [vmem:[#allocation9 + $0x138] sm:$0xff]
          %v1210 = vld [vmem:[#allocation9 + $0x140] sm:$0xff]
          %v1211 = vld [vmem:[#allocation9 + $0x148] sm:$0xff]
          %v1212 = vld [vmem:[#allocation9 + $0x150] sm:$0xff]
          %v1213 = vld [vmem:[#allocation9 + $0x158] sm:$0xff]
          %v1214 = vld [vmem:[#allocation9 + $0x160] sm:$0xff]
          %v1215 = vld [vmem:[#allocation9 + $0x168] sm:$0xff]
          %v1216 = vld [vmem:[#allocation9 + $0x170] sm:$0xff]
          %v1217 = vld [vmem:[#allocation9 + $0x178] sm:$0xff]
          %v1218 = vld [vmem:[#allocation9 + $0x180] sm:$0xff]
          %v1219 = vld [vmem:[#allocation9 + $0x188] sm:$0xff]
          %v1220 = vld [vmem:[#allocation9 + $0x190] sm:$0xff]
          %v1221 = vld [vmem:[#allocation9 + $0x198] sm:$0xff]
          %v1222 = vld [vmem:[#allocation9 + $0x1a0] sm:$0xff]
          %v1223 = vld [vmem:[#allocation9 + $0x1a8] sm:$0xff]
          %v1224 = vld [vmem:[#allocation9 + $0x1b0] sm:$0xff]
          %v1225 = vld [vmem:[#allocation9 + $0x1b8] sm:$0xff]
          %v1226 = vld [vmem:[#allocation9 + $0x1c0] sm:$0xff]
          %v1227 = vld [vmem:[#allocation9 + $0x1c8] sm:$0xff]
          %v1228 = vld [vmem:[#allocation9 + $0x1d0] sm:$0xff]
          %v1229 = vld [vmem:[#allocation9 + $0x1d8] sm:$0xff]
          %v1230 = vld [vmem:[#allocation9 + $0x1e0] sm:$0xff]
          %v1231 = vld [vmem:[#allocation9 + $0x1e8] sm:$0xff]
          %v1232 = vld [vmem:[#allocation9 + $0x1f0] sm:$0xff]
          %v1233 = vld [vmem:[#allocation9 + $0x1f8] sm:$0xff]
          %v1234 = vld [vmem:[#allocation9 + $0x200] sm:$0xff]
          %v1235 = vld [vmem:[#allocation9 + $0x208] sm:$0xff]
          %v1236 = vld [vmem:[#allocation9 + $0x210] sm:$0xff]
          %v1237 = vld [vmem:[#allocation9 + $0x218] sm:$0xff]
          %v1238 = vld [vmem:[#allocation9 + $0x220] sm:$0xff]
          %v1239 = vld [vmem:[#allocation9 + $0x228] sm:$0xff]
          %v1240 = vld [vmem:[#allocation9 + $0x230] sm:$0xff]
          %v1241 = vld [vmem:[#allocation9 + $0x238] sm:$0xff]
          %v1242 = vld [vmem:[#allocation9 + $0x240] sm:$0xff]
          %v1243 = vld [vmem:[#allocation9 + $0x248] sm:$0xff]
          %v1244 = vld [vmem:[#allocation9 + $0x250] sm:$0xff]
          %v1245 = vld [vmem:[#allocation9 + $0x258] sm:$0xff]
          %v1246 = vld [vmem:[#allocation9 + $0x260] sm:$0xff]
          %v1247 = vld [vmem:[#allocation9 + $0x268] sm:$0xff]
          %v1248 = vld [vmem:[#allocation9 + $0x270] sm:$0xff]
          %v1249 = vld [vmem:[#allocation9 + $0x278] sm:$0xff]
          %v1250 = vld [vmem:[#allocation9 + $0x280] sm:$0xff]
          %v1251 = vld [vmem:[#allocation9 + $0x288] sm:$0xff]
          %v1252 = vld [vmem:[#allocation9 + $0x290] sm:$0xff]
          %v1253 = vld [vmem:[#allocation9 + $0x298] sm:$0xff]
          %v1254 = vld [vmem:[#allocation9 + $0x2a0] sm:$0xff]
          %v1255 = vld [vmem:[#allocation9 + $0x2a8] sm:$0xff]
          %v1256 = vld [vmem:[#allocation9 + $0x2b0] sm:$0xff]
          %v1257 = vld [vmem:[#allocation9 + $0x2b8] sm:$0xff]
          %v1258 = vld [vmem:[#allocation9 + $0x2c0] sm:$0xff]
          %v1259 = vld [vmem:[#allocation9 + $0x2c8] sm:$0xff]
          %v1260 = vld [vmem:[#allocation9 + $0x2d0] sm:$0xff]
          %v1261 = vld [vmem:[#allocation9 + $0x2d8] sm:$0xff]
          %v1262 = vld [vmem:[#allocation9 + $0x2e0] sm:$0xff]
          %v1263 = vld [vmem:[#allocation9 + $0x2e8] sm:$0xff]
          %v1264 = vld [vmem:[#allocation9 + $0x2f0] sm:$0xff]
          %v1265 = vld [vmem:[#allocation9 + $0x2f8] sm:$0xff]
          %v1266 = vld [vmem:[#allocation9 + $0x300] sm:$0xff]
          %v1267 = vld [vmem:[#allocation9 + $0x308] sm:$0xff]
          %v1268 = vld [vmem:[#allocation9 + $0x310] sm:$0xff]
          %v1269 = vld [vmem:[#allocation9 + $0x318] sm:$0xff]
          %v1270 = vld [vmem:[#allocation9 + $0x320] sm:$0xff]
          %v1271 = vld [vmem:[#allocation9 + $0x328] sm:$0xff]
          %v1272 = vld [vmem:[#allocation9 + $0x330] sm:$0xff]
          %v1273 = vld [vmem:[#allocation9 + $0x338] sm:$0xff]
          %v1274 = vld [vmem:[#allocation9 + $0x340] sm:$0xff]
          %v1275 = vld [vmem:[#allocation9 + $0x348] sm:$0xff]
          %v1276 = vld [vmem:[#allocation9 + $0x350] sm:$0xff]
          %v1277 = vld [vmem:[#allocation9 + $0x358] sm:$0xff]
          %v1278 = vld [vmem:[#allocation9 + $0x360] sm:$0xff]
          %v1279 = vld [vmem:[#allocation9 + $0x368] sm:$0xff]
          %v1280 = vld [vmem:[#allocation9 + $0x370] sm:$0xff]
          %v1281 = vld [vmem:[#allocation9 + $0x378] sm:$0xff]
          %v1282 = vld [vmem:[#allocation9 + $0x380] sm:$0xff]
          %v1283 = vld [vmem:[#allocation9 + $0x388] sm:$0xff]
          %v1284 = vld [vmem:[#allocation9 + $0x390] sm:$0xff]
          %v1285 = vld [vmem:[#allocation9 + $0x398] sm:$0xff]
          %v1286 = vld [vmem:[#allocation9 + $0x3a0] sm:$0xff]
          %v1287 = vld [vmem:[#allocation9 + $0x3a8] sm:$0xff]
          %v1288 = vld [vmem:[#allocation9 + $0x3b0] sm:$0xff]
          %v1289 = vld [vmem:[#allocation9 + $0x3b8] sm:$0xff]
          %v1290 = vld [vmem:[#allocation9 + $0x3c0] sm:$0xff]
          %v1291 = vld [vmem:[#allocation9 + $0x3c8] sm:$0xff]
          %v1292 = vld [vmem:[#allocation9 + $0x3d0] sm:$0xff]
          %v1293 = vld [vmem:[#allocation9 + $0x3d8] sm:$0xff]
          %v1294 = vld [vmem:[#allocation9 + $0x3e0] sm:$0xff]
          %v1295 = vld [vmem:[#allocation9 + $0x3e8] sm:$0xff]
          %v1296 = vld [vmem:[#allocation9 + $0x3f0] sm:$0xff]
          %v1297 = vld [vmem:[#allocation9 + $0x3f8] sm:$0xff]
          %v1298 = vld [vmem:[#allocation9 + $0x400] sm:$0xff]
          %v1299 = vld [vmem:[#allocation9 + $0x408] sm:$0xff]
          %v1300 = vld [vmem:[#allocation9 + $0x410] sm:$0xff]
          %v1301 = vld [vmem:[#allocation9 + $0x418] sm:$0xff]
          %v1302 = vld [vmem:[#allocation9 + $0x420] sm:$0xff]
          %v1303 = vld [vmem:[#allocation9 + $0x428] sm:$0xff]
          %v1304 = vld [vmem:[#allocation9 + $0x430] sm:$0xff]
          %v1305 = vld [vmem:[#allocation9 + $0x438] sm:$0xff]
          %v1306 = vld [vmem:[#allocation9 + $0x440] sm:$0xff]
          %v1307 = vld [vmem:[#allocation9 + $0x448] sm:$0xff]
          %v1308 = vld [vmem:[#allocation9 + $0x450] sm:$0xff]
          %v1309 = vld [vmem:[#allocation9 + $0x458] sm:$0xff]
          %v1310 = vld [vmem:[#allocation9 + $0x460] sm:$0xff]
          %v1311 = vld [vmem:[#allocation9 + $0x468] sm:$0xff]
          %v1312 = vld [vmem:[#allocation9 + $0x470] sm:$0xff]
          %v1313 = vld [vmem:[#allocation9 + $0x478] sm:$0xff]
          %v1314 = vld [vmem:[#allocation9 + $0x480] sm:$0xff]
          %v1315 = vld [vmem:[#allocation9 + $0x488] sm:$0xff]
          %v1316 = vld [vmem:[#allocation9 + $0x490] sm:$0xff]
          %v1317 = vld [vmem:[#allocation9 + $0x498] sm:$0xff]
          %v1318 = vld [vmem:[#allocation9 + $0x4a0] sm:$0xff]
          %v1319 = vld [vmem:[#allocation9 + $0x4a8] sm:$0xff]
          %v1320 = vld [vmem:[#allocation9 + $0x4b0] sm:$0xff]
          %v1321 = vld [vmem:[#allocation9 + $0x4b8] sm:$0xff]
          %v1322 = vld [vmem:[#allocation9 + $0x4c0] sm:$0xff]
          %v1323 = vld [vmem:[#allocation9 + $0x4c8] sm:$0xff]
          %v1324 = vld [vmem:[#allocation9 + $0x4d0] sm:$0xff]
          %v1325 = vld [vmem:[#allocation9 + $0x4d8] sm:$0xff]
          %v1326 = vld [vmem:[#allocation9 + $0x4e0] sm:$0xff]
          %v1327 = vld [vmem:[#allocation9 + $0x4e8] sm:$0xff]
          %v1328 = vld [vmem:[#allocation9 + $0x4f0] sm:$0xff]
          %v1329 = vld [vmem:[#allocation9 + $0x4f8] sm:$0xff]
          %v1330 = vld [vmem:[#allocation9 + $0x500] sm:$0xff]
          %v1331 = vld [vmem:[#allocation9 + $0x508] sm:$0xff]
          %v1332 = vld [vmem:[#allocation9 + $0x510] sm:$0xff]
          %v1333 = vld [vmem:[#allocation9 + $0x518] sm:$0xff]
          %v1334 = vld [vmem:[#allocation9 + $0x520] sm:$0xff]
          %v1335 = vld [vmem:[#allocation9 + $0x528] sm:$0xff]
          %v1336 = vld [vmem:[#allocation9 + $0x530] sm:$0xff]
          %v1337 = vld [vmem:[#allocation9 + $0x538] sm:$0xff]
          %v1338 = vld [vmem:[#allocation9 + $0x540] sm:$0xff]
          %v1339 = vld [vmem:[#allocation9 + $0x548] sm:$0xff]
          %v1340 = vld [vmem:[#allocation9 + $0x550] sm:$0xff]
          %v1341 = vld [vmem:[#allocation9 + $0x558] sm:$0xff]
          %v1342 = vld [vmem:[#allocation9 + $0x560] sm:$0xff]
          %v1343 = vld [vmem:[#allocation9 + $0x568] sm:$0xff]
          %v1344 = vld [vmem:[#allocation9 + $0x570] sm:$0xff]
          %v1345 = vld [vmem:[#allocation9 + $0x578] sm:$0xff]
          %v1346 = vld [vmem:[#allocation9 + $0x580] sm:$0xff]
          %v1347 = vld [vmem:[#allocation9 + $0x588] sm:$0xff]
          %v1348 = vld [vmem:[#allocation9 + $0x590] sm:$0xff]
          %v1349 = vld [vmem:[#allocation9 + $0x598] sm:$0xff]
          %v1350 = vld [vmem:[#allocation9 + $0x5a0] sm:$0xff]
          %v1351 = vld [vmem:[#allocation9 + $0x5a8] sm:$0xff]
          %v1352 = vld [vmem:[#allocation9 + $0x5b0] sm:$0xff]
          %v1353 = vld [vmem:[#allocation9 + $0x5b8] sm:$0xff]
          %v1354 = vld [vmem:[#allocation9 + $0x5c0] sm:$0xff]
          %v1355 = vld [vmem:[#allocation9 + $0x5c8] sm:$0xff]
          %v1356 = vld [vmem:[#allocation9 + $0x5d0] sm:$0xff]
          %v1357 = vld [vmem:[#allocation9 + $0x5d8] sm:$0xff]
          %v1358 = vld [vmem:[#allocation9 + $0x5e0] sm:$0xff]
          %v1359 = vld [vmem:[#allocation9 + $0x5e8] sm:$0xff]
          %v1360 = vld [vmem:[#allocation9 + $0x5f0] sm:$0xff]
          %v1361 = vld [vmem:[#allocation9 + $0x5f8] sm:$0xff]
          %v1362 = vld [vmem:[#allocation11] sm:$0x3f]
          %v1364 = vperm.slane %v1362, 0
          %v1365 = vperm.slane %v1362, 1
          %v1366 = vperm.slane %v1362, 2
          %v1367 = vperm.slane %v1362, 3
          %v1368 = vperm.slane %v1362, 4
          %v1369 = vperm.slane %v1362, 5
          %v1568 = vunpack.c.l.b16 %v1170
          %v1569 = vunpack.c.h.b16 %v1170
          %v1570 = vunpack.c.l.b16 %v1171
          %v1571 = vunpack.c.h.b16 %v1171
          %v1572 = vunpack.c.l.b16 %v1172
          %v1573 = vunpack.c.h.b16 %v1172
          %v1574 = vunpack.c.l.b16 %v1173
          %v1575 = vunpack.c.h.b16 %v1173
          %v1576 = vunpack.c.l.b16 %v1174
          %v1577 = vunpack.c.h.b16 %v1174
          %v1578 = vunpack.c.l.b16 %v1175
          %v1579 = vunpack.c.h.b16 %v1175
          %v1580 = vunpack.c.l.b16 %v1176
          %v1581 = vunpack.c.h.b16 %v1176
          %v1582 = vunpack.c.l.b16 %v1177
          %v1583 = vunpack.c.h.b16 %v1177
          %v1584 = vunpack.c.l.b16 %v1178
          %v1585 = vunpack.c.h.b16 %v1178
          %v1586 = vunpack.c.l.b16 %v1179
          %v1587 = vunpack.c.h.b16 %v1179
          %v1588 = vunpack.c.l.b16 %v1180
          %v1589 = vunpack.c.h.b16 %v1180
          %v1590 = vunpack.c.l.b16 %v1181
          %v1591 = vunpack.c.h.b16 %v1181
          %v1592 = vunpack.c.l.b16 %v1182
          %v1593 = vunpack.c.h.b16 %v1182
          %v1594 = vunpack.c.l.b16 %v1183
          %v1595 = vunpack.c.h.b16 %v1183
          %v1596 = vunpack.c.l.b16 %v1184
          %v1597 = vunpack.c.h.b16 %v1184
          %v1598 = vunpack.c.l.b16 %v1185
          %v1599 = vunpack.c.h.b16 %v1185
          %v1600 = vunpack.c.l.b16 %v1186
          %v1601 = vunpack.c.h.b16 %v1186
          %v1602 = vunpack.c.l.b16 %v1187
          %v1603 = vunpack.c.h.b16 %v1187
          %v1604 = vunpack.c.l.b16 %v1188
          %v1605 = vunpack.c.h.b16 %v1188
          %v1606 = vunpack.c.l.b16 %v1189
          %v1607 = vunpack.c.h.b16 %v1189
          %v1608 = vunpack.c.l.b16 %v1190
          %v1609 = vunpack.c.h.b16 %v1190
          %v1610 = vunpack.c.l.b16 %v1191
          %v1611 = vunpack.c.h.b16 %v1191
          %v1612 = vunpack.c.l.b16 %v1192
          %v1613 = vunpack.c.h.b16 %v1192
          %v1614 = vunpack.c.l.b16 %v1193
          %v1615 = vunpack.c.h.b16 %v1193
          %v1616 = vunpack.c.l.b16 %v1194
          %v1617 = vunpack.c.h.b16 %v1194
          %v1618 = vunpack.c.l.b16 %v1195
          %v1619 = vunpack.c.h.b16 %v1195
          %v1620 = vunpack.c.l.b16 %v1196
          %v1621 = vunpack.c.h.b16 %v1196
          %v1622 = vunpack.c.l.b16 %v1197
          %v1623 = vunpack.c.h.b16 %v1197
          %v1624 = vunpack.c.l.b16 %v1198
          %v1625 = vunpack.c.h.b16 %v1198
          %v1626 = vunpack.c.l.b16 %v1199
          %v1627 = vunpack.c.h.b16 %v1199
          %v1628 = vunpack.c.l.b16 %v1200
          %v1629 = vunpack.c.h.b16 %v1200
          %v1630 = vunpack.c.l.b16 %v1201
          %v1631 = vunpack.c.h.b16 %v1201
          %v1632 = vunpack.c.l.b16 %v1202
          %v1633 = vunpack.c.h.b16 %v1202
          %v1634 = vunpack.c.l.b16 %v1203
          %v1635 = vunpack.c.h.b16 %v1203
          %v1636 = vunpack.c.l.b16 %v1204
          %v1637 = vunpack.c.h.b16 %v1204
          %v1638 = vunpack.c.l.b16 %v1205
          %v1639 = vunpack.c.h.b16 %v1205
          %v1640 = vunpack.c.l.b16 %v1206
          %v1641 = vunpack.c.h.b16 %v1206
          %v1642 = vunpack.c.l.b16 %v1207
          %v1643 = vunpack.c.h.b16 %v1207
          %v1644 = vunpack.c.l.b16 %v1208
          %v1645 = vunpack.c.h.b16 %v1208
          %v1646 = vunpack.c.l.b16 %v1209
          %v1647 = vunpack.c.h.b16 %v1209
          %v1648 = vunpack.c.l.b16 %v1210
          %v1649 = vunpack.c.h.b16 %v1210
          %v1650 = vunpack.c.l.b16 %v1211
          %v1651 = vunpack.c.h.b16 %v1211
          %v1652 = vunpack.c.l.b16 %v1212
          %v1653 = vunpack.c.h.b16 %v1212
          %v1654 = vunpack.c.l.b16 %v1213
          %v1655 = vunpack.c.h.b16 %v1213
          %v1656 = vunpack.c.l.b16 %v1214
          %v1657 = vunpack.c.h.b16 %v1214
          %v1658 = vunpack.c.l.b16 %v1215
          %v1659 = vunpack.c.h.b16 %v1215
          %v1660 = vunpack.c.l.b16 %v1216
          %v1661 = vunpack.c.h.b16 %v1216
          %v1662 = vunpack.c.l.b16 %v1217
          %v1663 = vunpack.c.h.b16 %v1217
          %v1664 = vunpack.c.l.b16 %v1218
          %v1665 = vunpack.c.h.b16 %v1218
          %v1666 = vunpack.c.l.b16 %v1219
          %v1667 = vunpack.c.h.b16 %v1219
          %v1668 = vunpack.c.l.b16 %v1220
          %v1669 = vunpack.c.h.b16 %v1220
          %v1670 = vunpack.c.l.b16 %v1221
          %v1671 = vunpack.c.h.b16 %v1221
          %v1672 = vunpack.c.l.b16 %v1222
          %v1673 = vunpack.c.h.b16 %v1222
          %v1674 = vunpack.c.l.b16 %v1223
          %v1675 = vunpack.c.h.b16 %v1223
          %v1676 = vunpack.c.l.b16 %v1224
          %v1677 = vunpack.c.h.b16 %v1224
          %v1678 = vunpack.c.l.b16 %v1225
          %v1679 = vunpack.c.h.b16 %v1225
          %v1680 = vunpack.c.l.b16 %v1226
          %v1681 = vunpack.c.h.b16 %v1226
          %v1682 = vunpack.c.l.b16 %v1227
          %v1683 = vunpack.c.h.b16 %v1227
          %v1684 = vunpack.c.l.b16 %v1228
          %v1685 = vunpack.c.h.b16 %v1228
          %v1686 = vunpack.c.l.b16 %v1229
          %v1687 = vunpack.c.h.b16 %v1229
          %v1688 = vunpack.c.l.b16 %v1230
          %v1689 = vunpack.c.h.b16 %v1230
          %v1690 = vunpack.c.l.b16 %v1231
          %v1691 = vunpack.c.h.b16 %v1231
          %v1692 = vunpack.c.l.b16 %v1232
          %v1693 = vunpack.c.h.b16 %v1232
          %v1694 = vunpack.c.l.b16 %v1233
          %v1695 = vunpack.c.h.b16 %v1233
          %v1696 = vunpack.c.l.b16 %v1234
          %v1697 = vunpack.c.h.b16 %v1234
          %v1698 = vunpack.c.l.b16 %v1235
          %v1699 = vunpack.c.h.b16 %v1235
          %v1700 = vunpack.c.l.b16 %v1236
          %v1701 = vunpack.c.h.b16 %v1236
          %v1702 = vunpack.c.l.b16 %v1237
          %v1703 = vunpack.c.h.b16 %v1237
          %v1704 = vunpack.c.l.b16 %v1238
          %v1705 = vunpack.c.h.b16 %v1238
          %v1706 = vunpack.c.l.b16 %v1239
          %v1707 = vunpack.c.h.b16 %v1239
          %v1708 = vunpack.c.l.b16 %v1240
          %v1709 = vunpack.c.h.b16 %v1240
          %v1710 = vunpack.c.l.b16 %v1241
          %v1711 = vunpack.c.h.b16 %v1241
          %v1712 = vunpack.c.l.b16 %v1242
          %v1713 = vunpack.c.h.b16 %v1242
          %v1714 = vunpack.c.l.b16 %v1243
          %v1715 = vunpack.c.h.b16 %v1243
          %v1716 = vunpack.c.l.b16 %v1244
          %v1717 = vunpack.c.h.b16 %v1244
          %v1718 = vunpack.c.l.b16 %v1245
          %v1719 = vunpack.c.h.b16 %v1245
          %v1720 = vunpack.c.l.b16 %v1246
          %v1721 = vunpack.c.h.b16 %v1246
          %v1722 = vunpack.c.l.b16 %v1247
          %v1723 = vunpack.c.h.b16 %v1247
          %v1724 = vunpack.c.l.b16 %v1248
          %v1725 = vunpack.c.h.b16 %v1248
          %v1726 = vunpack.c.l.b16 %v1249
          %v1727 = vunpack.c.h.b16 %v1249
          %v1728 = vunpack.c.l.b16 %v1250
          %v1729 = vunpack.c.h.b16 %v1250
          %v1730 = vunpack.c.l.b16 %v1251
          %v1731 = vunpack.c.h.b16 %v1251
          %v1732 = vunpack.c.l.b16 %v1252
          %v1733 = vunpack.c.h.b16 %v1252
          %v1734 = vunpack.c.l.b16 %v1253
          %v1735 = vunpack.c.h.b16 %v1253
          %v1736 = vunpack.c.l.b16 %v1254
          %v1737 = vunpack.c.h.b16 %v1254
          %v1738 = vunpack.c.l.b16 %v1255
          %v1739 = vunpack.c.h.b16 %v1255
          %v1740 = vunpack.c.l.b16 %v1256
          %v1741 = vunpack.c.h.b16 %v1256
          %v1742 = vunpack.c.l.b16 %v1257
          %v1743 = vunpack.c.h.b16 %v1257
          %v1744 = vunpack.c.l.b16 %v1258
          %v1745 = vunpack.c.h.b16 %v1258
          %v1746 = vunpack.c.l.b16 %v1259
          %v1747 = vunpack.c.h.b16 %v1259
          %v1748 = vunpack.c.l.b16 %v1260
          %v1749 = vunpack.c.h.b16 %v1260
          %v1750 = vunpack.c.l.b16 %v1261
          %v1751 = vunpack.c.h.b16 %v1261
          %v1752 = vunpack.c.l.b16 %v1262
          %v1753 = vunpack.c.h.b16 %v1262
          %v1754 = vunpack.c.l.b16 %v1263
          %v1755 = vunpack.c.h.b16 %v1263
          %v1756 = vunpack.c.l.b16 %v1264
          %v1757 = vunpack.c.h.b16 %v1264
          %v1758 = vunpack.c.l.b16 %v1265
          %v1759 = vunpack.c.h.b16 %v1265
          %v1760 = vunpack.c.l.b16 %v1266
          %v1761 = vunpack.c.h.b16 %v1266
          %v1762 = vunpack.c.l.b16 %v1267
          %v1763 = vunpack.c.h.b16 %v1267
          %v1764 = vunpack.c.l.b16 %v1268
          %v1765 = vunpack.c.h.b16 %v1268
          %v1766 = vunpack.c.l.b16 %v1269
          %v1767 = vunpack.c.h.b16 %v1269
          %v1768 = vunpack.c.l.b16 %v1270
          %v1769 = vunpack.c.h.b16 %v1270
          %v1770 = vunpack.c.l.b16 %v1271
          %v1771 = vunpack.c.h.b16 %v1271
          %v1772 = vunpack.c.l.b16 %v1272
          %v1773 = vunpack.c.h.b16 %v1272
          %v1774 = vunpack.c.l.b16 %v1273
          %v1775 = vunpack.c.h.b16 %v1273
          %v1776 = vunpack.c.l.b16 %v1274
          %v1777 = vunpack.c.h.b16 %v1274
          %v1778 = vunpack.c.l.b16 %v1275
          %v1779 = vunpack.c.h.b16 %v1275
          %v1780 = vunpack.c.l.b16 %v1276
          %v1781 = vunpack.c.h.b16 %v1276
          %v1782 = vunpack.c.l.b16 %v1277
          %v1783 = vunpack.c.h.b16 %v1277
          %v1784 = vunpack.c.l.b16 %v1278
          %v1785 = vunpack.c.h.b16 %v1278
          %v1786 = vunpack.c.l.b16 %v1279
          %v1787 = vunpack.c.h.b16 %v1279
          %v1788 = vunpack.c.l.b16 %v1280
          %v1789 = vunpack.c.h.b16 %v1280
          %v1790 = vunpack.c.l.b16 %v1281
          %v1791 = vunpack.c.h.b16 %v1281
          %v1792 = vunpack.c.l.b16 %v1282
          %v1793 = vunpack.c.h.b16 %v1282
          %v1794 = vunpack.c.l.b16 %v1283
          %v1795 = vunpack.c.h.b16 %v1283
          %v1796 = vunpack.c.l.b16 %v1284
          %v1797 = vunpack.c.h.b16 %v1284
          %v1798 = vunpack.c.l.b16 %v1285
          %v1799 = vunpack.c.h.b16 %v1285
          %v1800 = vunpack.c.l.b16 %v1286
          %v1801 = vunpack.c.h.b16 %v1286
          %v1802 = vunpack.c.l.b16 %v1287
          %v1803 = vunpack.c.h.b16 %v1287
          %v1804 = vunpack.c.l.b16 %v1288
          %v1805 = vunpack.c.h.b16 %v1288
          %v1806 = vunpack.c.l.b16 %v1289
          %v1807 = vunpack.c.h.b16 %v1289
          %v1808 = vunpack.c.l.b16 %v1290
          %v1809 = vunpack.c.h.b16 %v1290
          %v1810 = vunpack.c.l.b16 %v1291
          %v1811 = vunpack.c.h.b16 %v1291
          %v1812 = vunpack.c.l.b16 %v1292
          %v1813 = vunpack.c.h.b16 %v1292
          %v1814 = vunpack.c.l.b16 %v1293
          %v1815 = vunpack.c.h.b16 %v1293
          %v1816 = vunpack.c.l.b16 %v1294
          %v1817 = vunpack.c.h.b16 %v1294
          %v1818 = vunpack.c.l.b16 %v1295
          %v1819 = vunpack.c.h.b16 %v1295
          %v1820 = vunpack.c.l.b16 %v1296
          %v1821 = vunpack.c.h.b16 %v1296
          %v1822 = vunpack.c.l.b16 %v1297
          %v1823 = vunpack.c.h.b16 %v1297
          %v1824 = vunpack.c.l.b16 %v1298
          %v1825 = vunpack.c.h.b16 %v1298
          %v1826 = vunpack.c.l.b16 %v1299
          %v1827 = vunpack.c.h.b16 %v1299
          %v1828 = vunpack.c.l.b16 %v1300
          %v1829 = vunpack.c.h.b16 %v1300
          %v1830 = vunpack.c.l.b16 %v1301
          %v1831 = vunpack.c.h.b16 %v1301
          %v1832 = vunpack.c.l.b16 %v1302
          %v1833 = vunpack.c.h.b16 %v1302
          %v1834 = vunpack.c.l.b16 %v1303
          %v1835 = vunpack.c.h.b16 %v1303
          %v1836 = vunpack.c.l.b16 %v1304
          %v1837 = vunpack.c.h.b16 %v1304
          %v1838 = vunpack.c.l.b16 %v1305
          %v1839 = vunpack.c.h.b16 %v1305
          %v1840 = vunpack.c.l.b16 %v1306
          %v1841 = vunpack.c.h.b16 %v1306
          %v1842 = vunpack.c.l.b16 %v1307
          %v1843 = vunpack.c.h.b16 %v1307
          %v1844 = vunpack.c.l.b16 %v1308
          %v1845 = vunpack.c.h.b16 %v1308
          %v1846 = vunpack.c.l.b16 %v1309
          %v1847 = vunpack.c.h.b16 %v1309
          %v1848 = vunpack.c.l.b16 %v1310
          %v1849 = vunpack.c.h.b16 %v1310
          %v1850 = vunpack.c.l.b16 %v1311
          %v1851 = vunpack.c.h.b16 %v1311
          %v1852 = vunpack.c.l.b16 %v1312
          %v1853 = vunpack.c.h.b16 %v1312
          %v1854 = vunpack.c.l.b16 %v1313
          %v1855 = vunpack.c.h.b16 %v1313
          %v1856 = vunpack.c.l.b16 %v1314
          %v1857 = vunpack.c.h.b16 %v1314
          %v1858 = vunpack.c.l.b16 %v1315
          %v1859 = vunpack.c.h.b16 %v1315
          %v1860 = vunpack.c.l.b16 %v1316
          %v1861 = vunpack.c.h.b16 %v1316
          %v1862 = vunpack.c.l.b16 %v1317
          %v1863 = vunpack.c.h.b16 %v1317
          %v1864 = vunpack.c.l.b16 %v1318
          %v1865 = vunpack.c.h.b16 %v1318
          %v1866 = vunpack.c.l.b16 %v1319
          %v1867 = vunpack.c.h.b16 %v1319
          %v1868 = vunpack.c.l.b16 %v1320
          %v1869 = vunpack.c.h.b16 %v1320
          %v1870 = vunpack.c.l.b16 %v1321
          %v1871 = vunpack.c.h.b16 %v1321
          %v1872 = vunpack.c.l.b16 %v1322
          %v1873 = vunpack.c.h.b16 %v1322
          %v1874 = vunpack.c.l.b16 %v1323
          %v1875 = vunpack.c.h.b16 %v1323
          %v1876 = vunpack.c.l.b16 %v1324
          %v1877 = vunpack.c.h.b16 %v1324
          %v1878 = vunpack.c.l.b16 %v1325
          %v1879 = vunpack.c.h.b16 %v1325
          %v1880 = vunpack.c.l.b16 %v1326
          %v1881 = vunpack.c.h.b16 %v1326
          %v1882 = vunpack.c.l.b16 %v1327
          %v1883 = vunpack.c.h.b16 %v1327
          %v1884 = vunpack.c.l.b16 %v1328
          %v1885 = vunpack.c.h.b16 %v1328
          %v1886 = vunpack.c.l.b16 %v1329
          %v1887 = vunpack.c.h.b16 %v1329
          %v1888 = vunpack.c.l.b16 %v1330
          %v1889 = vunpack.c.h.b16 %v1330
          %v1890 = vunpack.c.l.b16 %v1331
          %v1891 = vunpack.c.h.b16 %v1331
          %v1892 = vunpack.c.l.b16 %v1332
          %v1893 = vunpack.c.h.b16 %v1332
          %v1894 = vunpack.c.l.b16 %v1333
          %v1895 = vunpack.c.h.b16 %v1333
          %v1896 = vunpack.c.l.b16 %v1334
          %v1897 = vunpack.c.h.b16 %v1334
          %v1898 = vunpack.c.l.b16 %v1335
          %v1899 = vunpack.c.h.b16 %v1335
          %v1900 = vunpack.c.l.b16 %v1336
          %v1901 = vunpack.c.h.b16 %v1336
          %v1902 = vunpack.c.l.b16 %v1337
          %v1903 = vunpack.c.h.b16 %v1337
          %v1904 = vunpack.c.l.b16 %v1338
          %v1905 = vunpack.c.h.b16 %v1338
          %v1906 = vunpack.c.l.b16 %v1339
          %v1907 = vunpack.c.h.b16 %v1339
          %v1908 = vunpack.c.l.b16 %v1340
          %v1909 = vunpack.c.h.b16 %v1340
          %v1910 = vunpack.c.l.b16 %v1341
          %v1911 = vunpack.c.h.b16 %v1341
          %v1912 = vunpack.c.l.b16 %v1342
          %v1913 = vunpack.c.h.b16 %v1342
          %v1914 = vunpack.c.l.b16 %v1343
          %v1915 = vunpack.c.h.b16 %v1343
          %v1916 = vunpack.c.l.b16 %v1344
          %v1917 = vunpack.c.h.b16 %v1344
          %v1918 = vunpack.c.l.b16 %v1345
          %v1919 = vunpack.c.h.b16 %v1345
          %v1920 = vunpack.c.l.b16 %v1346
          %v1921 = vunpack.c.h.b16 %v1346
          %v1922 = vunpack.c.l.b16 %v1347
          %v1923 = vunpack.c.h.b16 %v1347
          %v1924 = vunpack.c.l.b16 %v1348
          %v1925 = vunpack.c.h.b16 %v1348
          %v1926 = vunpack.c.l.b16 %v1349
          %v1927 = vunpack.c.h.b16 %v1349
          %v1928 = vunpack.c.l.b16 %v1350
          %v1929 = vunpack.c.h.b16 %v1350
          %v1930 = vunpack.c.l.b16 %v1351
          %v1931 = vunpack.c.h.b16 %v1351
          %v1932 = vunpack.c.l.b16 %v1352
          %v1933 = vunpack.c.h.b16 %v1352
          %v1934 = vunpack.c.l.b16 %v1353
          %v1935 = vunpack.c.h.b16 %v1353
          %v1936 = vunpack.c.l.b16 %v1354
          %v1937 = vunpack.c.h.b16 %v1354
          %v1938 = vunpack.c.l.b16 %v1355
          %v1939 = vunpack.c.h.b16 %v1355
          %v1940 = vunpack.c.l.b16 %v1356
          %v1941 = vunpack.c.h.b16 %v1356
          %v1942 = vunpack.c.l.b16 %v1357
          %v1943 = vunpack.c.h.b16 %v1357
          %v1944 = vunpack.c.l.b16 %v1358
          %v1945 = vunpack.c.h.b16 %v1358
          %v1946 = vunpack.c.l.b16 %v1359
          %v1947 = vunpack.c.h.b16 %v1359
          %v1948 = vunpack.c.l.b16 %v1360
          %v1949 = vunpack.c.h.b16 %v1360
          %v1950 = vunpack.c.l.b16 %v1361
          %v1951 = vunpack.c.h.b16 %v1361
          %v1952 = vpack.c.b16 %v1574, %v1568
          %v1953 = vpack.c.b16 %v1575, %v1569
          %v1954 = vpack.c.b16 %v1576, %v1570
          %v1955 = vpack.c.b16 %v1577, %v1571
          %v1956 = vpack.c.b16 %v1578, %v1572
          %v1957 = vpack.c.b16 %v1579, %v1573
          %v1958 = vpack.c.b16 %v1586, %v1580
          %v1959 = vpack.c.b16 %v1587, %v1581
          %v1960 = vpack.c.b16 %v1588, %v1582
          %v1961 = vpack.c.b16 %v1589, %v1583
          %v1962 = vpack.c.b16 %v1590, %v1584
          %v1963 = vpack.c.b16 %v1591, %v1585
          %v1964 = vpack.c.b16 %v1598, %v1592
          %v1965 = vpack.c.b16 %v1599, %v1593
          %v1966 = vpack.c.b16 %v1600, %v1594
          %v1967 = vpack.c.b16 %v1601, %v1595
          %v1968 = vpack.c.b16 %v1602, %v1596
          %v1969 = vpack.c.b16 %v1603, %v1597
          %v1970 = vpack.c.b16 %v1610, %v1604
          %v1971 = vpack.c.b16 %v1611, %v1605
          %v1972 = vpack.c.b16 %v1612, %v1606
          %v1973 = vpack.c.b16 %v1613, %v1607
          %v1974 = vpack.c.b16 %v1614, %v1608
          %v1975 = vpack.c.b16 %v1615, %v1609
          %v1976 = vpack.c.b16 %v1622, %v1616
          %v1977 = vpack.c.b16 %v1623, %v1617
          %v1978 = vpack.c.b16 %v1624, %v1618
          %v1979 = vpack.c.b16 %v1625, %v1619
          %v1980 = vpack.c.b16 %v1626, %v1620
          %v1981 = vpack.c.b16 %v1627, %v1621
          %v1982 = vpack.c.b16 %v1634, %v1628
          %v1983 = vpack.c.b16 %v1635, %v1629
          %v1984 = vpack.c.b16 %v1636, %v1630
          %v1985 = vpack.c.b16 %v1637, %v1631
          %v1986 = vpack.c.b16 %v1638, %v1632
          %v1987 = vpack.c.b16 %v1639, %v1633
          %v1988 = vpack.c.b16 %v1646, %v1640
          %v1989 = vpack.c.b16 %v1647, %v1641
          %v1990 = vpack.c.b16 %v1648, %v1642
          %v1991 = vpack.c.b16 %v1649, %v1643
          %v1992 = vpack.c.b16 %v1650, %v1644
          %v1993 = vpack.c.b16 %v1651, %v1645
          %v1994 = vpack.c.b16 %v1658, %v1652
          %v1995 = vpack.c.b16 %v1659, %v1653
          %v1996 = vpack.c.b16 %v1660, %v1654
          %v1997 = vpack.c.b16 %v1661, %v1655
          %v1998 = vpack.c.b16 %v1662, %v1656
          %v1999 = vpack.c.b16 %v1663, %v1657
          %v2000 = vpack.c.b16 %v1670, %v1664
          %v2001 = vpack.c.b16 %v1671, %v1665
          %v2002 = vpack.c.b16 %v1672, %v1666
          %v2003 = vpack.c.b16 %v1673, %v1667
          %v2004 = vpack.c.b16 %v1674, %v1668
          %v2005 = vpack.c.b16 %v1675, %v1669
          %v2006 = vpack.c.b16 %v1682, %v1676
          %v2007 = vpack.c.b16 %v1683, %v1677
          %v2008 = vpack.c.b16 %v1684, %v1678
          %v2009 = vpack.c.b16 %v1685, %v1679
          %v2010 = vpack.c.b16 %v1686, %v1680
          %v2011 = vpack.c.b16 %v1687, %v1681
          %v2012 = vpack.c.b16 %v1694, %v1688
          %v2013 = vpack.c.b16 %v1695, %v1689
          %v2014 = vpack.c.b16 %v1696, %v1690
          %v2015 = vpack.c.b16 %v1697, %v1691
          %v2016 = vpack.c.b16 %v1698, %v1692
          %v2017 = vpack.c.b16 %v1699, %v1693
          %v2018 = vpack.c.b16 %v1706, %v1700
          %v2019 = vpack.c.b16 %v1707, %v1701
          %v2020 = vpack.c.b16 %v1708, %v1702
          %v2021 = vpack.c.b16 %v1709, %v1703
          %v2022 = vpack.c.b16 %v1710, %v1704
          %v2023 = vpack.c.b16 %v1711, %v1705
          %v2024 = vpack.c.b16 %v1718, %v1712
          %v2025 = vpack.c.b16 %v1719, %v1713
          %v2026 = vpack.c.b16 %v1720, %v1714
          %v2027 = vpack.c.b16 %v1721, %v1715
          %v2028 = vpack.c.b16 %v1722, %v1716
          %v2029 = vpack.c.b16 %v1723, %v1717
          %v2030 = vpack.c.b16 %v1730, %v1724
          %v2031 = vpack.c.b16 %v1731, %v1725
          %v2032 = vpack.c.b16 %v1732, %v1726
          %v2033 = vpack.c.b16 %v1733, %v1727
          %v2034 = vpack.c.b16 %v1734, %v1728
          %v2035 = vpack.c.b16 %v1735, %v1729
          %v2036 = vpack.c.b16 %v1742, %v1736
          %v2037 = vpack.c.b16 %v1743, %v1737
          %v2038 = vpack.c.b16 %v1744, %v1738
          %v2039 = vpack.c.b16 %v1745, %v1739
          %v2040 = vpack.c.b16 %v1746, %v1740
          %v2041 = vpack.c.b16 %v1747, %v1741
          %v2042 = vpack.c.b16 %v1754, %v1748
          %v2043 = vpack.c.b16 %v1755, %v1749
          %v2044 = vpack.c.b16 %v1756, %v1750
          %v2045 = vpack.c.b16 %v1757, %v1751
          %v2046 = vpack.c.b16 %v1758, %v1752
          %v2047 = vpack.c.b16 %v1759, %v1753
          %v2048 = vpack.c.b16 %v1766, %v1760
          %v2049 = vpack.c.b16 %v1767, %v1761
          %v2050 = vpack.c.b16 %v1768, %v1762
          %v2051 = vpack.c.b16 %v1769, %v1763
          %v2052 = vpack.c.b16 %v1770, %v1764
          %v2053 = vpack.c.b16 %v1771, %v1765
          %v2054 = vpack.c.b16 %v1778, %v1772
          %v2055 = vpack.c.b16 %v1779, %v1773
          %v2056 = vpack.c.b16 %v1780, %v1774
          %v2057 = vpack.c.b16 %v1781, %v1775
          %v2058 = vpack.c.b16 %v1782, %v1776
          %v2059 = vpack.c.b16 %v1783, %v1777
          %v2060 = vpack.c.b16 %v1790, %v1784
          %v2061 = vpack.c.b16 %v1791, %v1785
          %v2062 = vpack.c.b16 %v1792, %v1786
          %v2063 = vpack.c.b16 %v1793, %v1787
          %v2064 = vpack.c.b16 %v1794, %v1788
          %v2065 = vpack.c.b16 %v1795, %v1789
          %v2066 = vpack.c.b16 %v1802, %v1796
          %v2067 = vpack.c.b16 %v1803, %v1797
          %v2068 = vpack.c.b16 %v1804, %v1798
          %v2069 = vpack.c.b16 %v1805, %v1799
          %v2070 = vpack.c.b16 %v1806, %v1800
          %v2071 = vpack.c.b16 %v1807, %v1801
          %v2072 = vpack.c.b16 %v1814, %v1808
          %v2073 = vpack.c.b16 %v1815, %v1809
          %v2074 = vpack.c.b16 %v1816, %v1810
          %v2075 = vpack.c.b16 %v1817, %v1811
          %v2076 = vpack.c.b16 %v1818, %v1812
          %v2077 = vpack.c.b16 %v1819, %v1813
          %v2078 = vpack.c.b16 %v1826, %v1820
          %v2079 = vpack.c.b16 %v1827, %v1821
          %v2080 = vpack.c.b16 %v1828, %v1822
          %v2081 = vpack.c.b16 %v1829, %v1823
          %v2082 = vpack.c.b16 %v1830, %v1824
          %v2083 = vpack.c.b16 %v1831, %v1825
          %v2084 = vpack.c.b16 %v1838, %v1832
          %v2085 = vpack.c.b16 %v1839, %v1833
          %v2086 = vpack.c.b16 %v1840, %v1834
          %v2087 = vpack.c.b16 %v1841, %v1835
          %v2088 = vpack.c.b16 %v1842, %v1836
          %v2089 = vpack.c.b16 %v1843, %v1837
          %v2090 = vpack.c.b16 %v1850, %v1844
          %v2091 = vpack.c.b16 %v1851, %v1845
          %v2092 = vpack.c.b16 %v1852, %v1846
          %v2093 = vpack.c.b16 %v1853, %v1847
          %v2094 = vpack.c.b16 %v1854, %v1848
          %v2095 = vpack.c.b16 %v1855, %v1849
          %v2096 = vpack.c.b16 %v1862, %v1856
          %v2097 = vpack.c.b16 %v1863, %v1857
          %v2098 = vpack.c.b16 %v1864, %v1858
          %v2099 = vpack.c.b16 %v1865, %v1859
          %v2100 = vpack.c.b16 %v1866, %v1860
          %v2101 = vpack.c.b16 %v1867, %v1861
          %v2102 = vpack.c.b16 %v1874, %v1868
          %v2103 = vpack.c.b16 %v1875, %v1869
          %v2104 = vpack.c.b16 %v1876, %v1870
          %v2105 = vpack.c.b16 %v1877, %v1871
          %v2106 = vpack.c.b16 %v1878, %v1872
          %v2107 = vpack.c.b16 %v1879, %v1873
          %v2108 = vpack.c.b16 %v1886, %v1880
          %v2109 = vpack.c.b16 %v1887, %v1881
          %v2110 = vpack.c.b16 %v1888, %v1882
          %v2111 = vpack.c.b16 %v1889, %v1883
          %v2112 = vpack.c.b16 %v1890, %v1884
          %v2113 = vpack.c.b16 %v1891, %v1885
          %v2114 = vpack.c.b16 %v1898, %v1892
          %v2115 = vpack.c.b16 %v1899, %v1893
          %v2116 = vpack.c.b16 %v1900, %v1894
          %v2117 = vpack.c.b16 %v1901, %v1895
          %v2118 = vpack.c.b16 %v1902, %v1896
          %v2119 = vpack.c.b16 %v1903, %v1897
          %v2120 = vpack.c.b16 %v1910, %v1904
          %v2121 = vpack.c.b16 %v1911, %v1905
          %v2122 = vpack.c.b16 %v1912, %v1906
          %v2123 = vpack.c.b16 %v1913, %v1907
          %v2124 = vpack.c.b16 %v1914, %v1908
          %v2125 = vpack.c.b16 %v1915, %v1909
          %v2126 = vpack.c.b16 %v1922, %v1916
          %v2127 = vpack.c.b16 %v1923, %v1917
          %v2128 = vpack.c.b16 %v1924, %v1918
          %v2129 = vpack.c.b16 %v1925, %v1919
          %v2130 = vpack.c.b16 %v1926, %v1920
          %v2131 = vpack.c.b16 %v1927, %v1921
          %v2132 = vpack.c.b16 %v1934, %v1928
          %v2133 = vpack.c.b16 %v1935, %v1929
          %v2134 = vpack.c.b16 %v1936, %v1930
          %v2135 = vpack.c.b16 %v1937, %v1931
          %v2136 = vpack.c.b16 %v1938, %v1932
          %v2137 = vpack.c.b16 %v1939, %v1933
          %v2138 = vpack.c.b16 %v1946, %v1940
          %v2139 = vpack.c.b16 %v1947, %v1941
          %v2140 = vpack.c.b16 %v1948, %v1942
          %v2141 = vpack.c.b16 %v1949, %v1943
          %v2142 = vpack.c.b16 %v1950, %v1944
          %v2143 = vpack.c.b16 %v1951, %v1945
          %2336 = vmatpush.bf16.msra.mxu0 %v1994
          %2337 = vmatpush.bf16.msra.mxu0 %v1988
          %2338 = vmatpush.bf16.msra.mxu0 %v1982
          %2339 = vmatpush.bf16.msra.mxu0 %v1976
          %2340 = vmatpush.bf16.msra.mxu0 %v1970
          %2341 = vmatpush.bf16.msra.mxu0 %v1964
          %2342 = vmatpush.bf16.msra.mxu0 %v1958
          %2343 = vmatpush.bf16.msra.mxu0 %v1952
          %2344 = vmatmul.bf16.gmra.mxu0 %v1166
          %v2345 = vpop.f32.mrf.mxu0
          %v2346 = vadd.f32 %v1364, %v2345
          %v2347 = vpop.f32.mrf.mxu0
          %v2348 = vadd.f32 %v1364, %v2347
          %2349 = vdwg.mxu0
          %2350 = vmatpush.bf16.msra.mxu0 %v2042
          %2351 = vmatpush.bf16.msra.mxu0 %v2036
          %2352 = vmatpush.bf16.msra.mxu0 %v2030
          %2353 = vmatpush.bf16.msra.mxu0 %v2024
          %2354 = vmatpush.bf16.msra.mxu0 %v2018
          %2355 = vmatpush.bf16.msra.mxu0 %v2012
          %2356 = vmatpush.bf16.msra.mxu0 %v2006
          %2357 = vmatpush.bf16.msra.mxu0 %v2000
          %2358 = vmatmul.bf16.gmra.mxu0 %v1167
          %v2359 = vpop.f32.mrf.mxu0
          %v2360 = vadd.f32 %v2346, %v2359
          %v2361 = vpop.f32.mrf.mxu0
          %v2362 = vadd.f32 %v2348, %v2361
          %2363 = vdwg.mxu0
          %2364 = vmatpush.bf16.msra.mxu0 %v2090
          %2365 = vmatpush.bf16.msra.mxu0 %v2084
          %2366 = vmatpush.bf16.msra.mxu0 %v2078
          %2367 = vmatpush.bf16.msra.mxu0 %v2072
          %2368 = vmatpush.bf16.msra.mxu0 %v2066
          %2369 = vmatpush.bf16.msra.mxu0 %v2060
          %2370 = vmatpush.bf16.msra.mxu0 %v2054
          %2371 = vmatpush.bf16.msra.mxu0 %v2048
          %2372 = vmatmul.bf16.gmra.mxu0 %v1168
          %v2373 = vpop.f32.mrf.mxu0
          %v2374 = vadd.f32 %v2360, %v2373
          %v2375 = vpop.f32.mrf.mxu0
          %v2376 = vadd.f32 %v2362, %v2375
          %2377 = vdwg.mxu0
          %2378 = vmatpush.bf16.msra.mxu0 %v2138
          %2379 = vmatpush.bf16.msra.mxu0 %v2132
          %2380 = vmatpush.bf16.msra.mxu0 %v2126
          %2381 = vmatpush.bf16.msra.mxu0 %v2120
          %2382 = vmatpush.bf16.msra.mxu0 %v2114
          %2383 = vmatpush.bf16.msra.mxu0 %v2108
          %2384 = vmatpush.bf16.msra.mxu0 %v2102
          %2385 = vmatpush.bf16.msra.mxu0 %v2096
          %2386 = vmatmul.bf16.gmra.mxu0 %v1169
          %v2387 = vpop.f32.mrf.mxu0
          %v2388 = vadd.f32 %v2374, %v2387
          %v2389 = vpop.f32.mrf.mxu0
          %v2390 = vadd.f32 %v2376, %v2389
          %2391 = vdwg.mxu0
          %2392 = vmatpush.bf16.msra.mxu0 %v1995
          %2393 = vmatpush.bf16.msra.mxu0 %v1989
          %2394 = vmatpush.bf16.msra.mxu0 %v1983
          %2395 = vmatpush.bf16.msra.mxu0 %v1977
          %2396 = vmatpush.bf16.msra.mxu0 %v1971
          %2397 = vmatpush.bf16.msra.mxu0 %v1965
          %2398 = vmatpush.bf16.msra.mxu0 %v1959
          %2399 = vmatpush.bf16.msra.mxu0 %v1953
          %2400 = vmatmul.bf16.gmra.mxu0 %v1166
          %v2401 = vpop.f32.mrf.mxu0
          %v2402 = vadd.f32 %v1365, %v2401
          %v2403 = vpop.f32.mrf.mxu0
          %v2404 = vadd.f32 %v1365, %v2403
          %2405 = vdwg.mxu0
          %2406 = vmatpush.bf16.msra.mxu0 %v2043
          %2407 = vmatpush.bf16.msra.mxu0 %v2037
          %2408 = vmatpush.bf16.msra.mxu0 %v2031
          %2409 = vmatpush.bf16.msra.mxu0 %v2025
          %2410 = vmatpush.bf16.msra.mxu0 %v2019
          %2411 = vmatpush.bf16.msra.mxu0 %v2013
          %2412 = vmatpush.bf16.msra.mxu0 %v2007
          %2413 = vmatpush.bf16.msra.mxu0 %v2001
          %2414 = vmatmul.bf16.gmra.mxu0 %v1167
          %v2415 = vpop.f32.mrf.mxu0
          %v2416 = vadd.f32 %v2402, %v2415
          %v2417 = vpop.f32.mrf.mxu0
          %v2418 = vadd.f32 %v2404, %v2417
          %2419 = vdwg.mxu0
          %2420 = vmatpush.bf16.msra.mxu0 %v2091
          %2421 = vmatpush.bf16.msra.mxu0 %v2085
          %2422 = vmatpush.bf16.msra.mxu0 %v2079
          %2423 = vmatpush.bf16.msra.mxu0 %v2073
          %2424 = vmatpush.bf16.msra.mxu0 %v2067
          %2425 = vmatpush.bf16.msra.mxu0 %v2061
          %2426 = vmatpush.bf16.msra.mxu0 %v2055
          %2427 = vmatpush.bf16.msra.mxu0 %v2049
          %2428 = vmatmul.bf16.gmra.mxu0 %v1168
          %v2429 = vpop.f32.mrf.mxu0
          %v2430 = vadd.f32 %v2416, %v2429
          %v2431 = vpop.f32.mrf.mxu0
          %v2432 = vadd.f32 %v2418, %v2431
          %2433 = vdwg.mxu0
          %2434 = vmatpush.bf16.msra.mxu0 %v2139
          %2435 = vmatpush.bf16.msra.mxu0 %v2133
          %2436 = vmatpush.bf16.msra.mxu0 %v2127
          %2437 = vmatpush.bf16.msra.mxu0 %v2121
          %2438 = vmatpush.bf16.msra.mxu0 %v2115
          %2439 = vmatpush.bf16.msra.mxu0 %v2109
          %2440 = vmatpush.bf16.msra.mxu0 %v2103
          %2441 = vmatpush.bf16.msra.mxu0 %v2097
          %2442 = vmatmul.bf16.gmra.mxu0 %v1169
          %v2443 = vpop.f32.mrf.mxu0
          %v2444 = vadd.f32 %v2430, %v2443
          %v2445 = vpop.f32.mrf.mxu0
          %v2446 = vadd.f32 %v2432, %v2445
          %2447 = vdwg.mxu0
          %2448 = vmatpush.bf16.msra.mxu0 %v1996
          %2449 = vmatpush.bf16.msra.mxu0 %v1990
          %2450 = vmatpush.bf16.msra.mxu0 %v1984
          %2451 = vmatpush.bf16.msra.mxu0 %v1978
          %2452 = vmatpush.bf16.msra.mxu0 %v1972
          %2453 = vmatpush.bf16.msra.mxu0 %v1966
          %2454 = vmatpush.bf16.msra.mxu0 %v1960
          %2455 = vmatpush.bf16.msra.mxu0 %v1954
          %2456 = vmatmul.bf16.gmra.mxu0 %v1166
          %v2457 = vpop.f32.mrf.mxu0
          %v2458 = vadd.f32 %v1366, %v2457
          %v2459 = vpop.f32.mrf.mxu0
          %v2460 = vadd.f32 %v1366, %v2459
          %2461 = vdwg.mxu0
          %2462 = vmatpush.bf16.msra.mxu0 %v2044
          %2463 = vmatpush.bf16.msra.mxu0 %v2038
          %2464 = vmatpush.bf16.msra.mxu0 %v2032
          %2465 = vmatpush.bf16.msra.mxu0 %v2026
          %2466 = vmatpush.bf16.msra.mxu0 %v2020
          %2467 = vmatpush.bf16.msra.mxu0 %v2014
          %2468 = vmatpush.bf16.msra.mxu0 %v2008
          %2469 = vmatpush.bf16.msra.mxu0 %v2002
          %2470 = vmatmul.bf16.gmra.mxu0 %v1167
          %v2471 = vpop.f32.mrf.mxu0
          %v2472 = vadd.f32 %v2458, %v2471
          %v2473 = vpop.f32.mrf.mxu0
          %v2474 = vadd.f32 %v2460, %v2473
          %2475 = vdwg.mxu0
          %2476 = vmatpush.bf16.msra.mxu0 %v2092
          %2477 = vmatpush.bf16.msra.mxu0 %v2086
          %2478 = vmatpush.bf16.msra.mxu0 %v2080
          %2479 = vmatpush.bf16.msra.mxu0 %v2074
          %2480 = vmatpush.bf16.msra.mxu0 %v2068
          %2481 = vmatpush.bf16.msra.mxu0 %v2062
          %2482 = vmatpush.bf16.msra.mxu0 %v2056
          %2483 = vmatpush.bf16.msra.mxu0 %v2050
          %2484 = vmatmul.bf16.gmra.mxu0 %v1168
          %v2485 = vpop.f32.mrf.mxu0
          %v2486 = vadd.f32 %v2472, %v2485
          %v2487 = vpop.f32.mrf.mxu0
          %v2488 = vadd.f32 %v2474, %v2487
          %2489 = vdwg.mxu0
          %2490 = vmatpush.bf16.msra.mxu0 %v2140
          %2491 = vmatpush.bf16.msra.mxu0 %v2134
          %2492 = vmatpush.bf16.msra.mxu0 %v2128
          %2493 = vmatpush.bf16.msra.mxu0 %v2122
          %2494 = vmatpush.bf16.msra.mxu0 %v2116
          %2495 = vmatpush.bf16.msra.mxu0 %v2110
          %2496 = vmatpush.bf16.msra.mxu0 %v2104
          %2497 = vmatpush.bf16.msra.mxu0 %v2098
          %2498 = vmatmul.bf16.gmra.mxu0 %v1169
          %v2499 = vpop.f32.mrf.mxu0
          %v2500 = vadd.f32 %v2486, %v2499
          %v2501 = vpop.f32.mrf.mxu0
          %v2502 = vadd.f32 %v2488, %v2501
          %2503 = vdwg.mxu0
          %2504 = vmatpush.bf16.msra.mxu0 %v1997
          %2505 = vmatpush.bf16.msra.mxu0 %v1991
          %2506 = vmatpush.bf16.msra.mxu0 %v1985
          %2507 = vmatpush.bf16.msra.mxu0 %v1979
          %2508 = vmatpush.bf16.msra.mxu0 %v1973
          %2509 = vmatpush.bf16.msra.mxu0 %v1967
          %2510 = vmatpush.bf16.msra.mxu0 %v1961
          %2511 = vmatpush.bf16.msra.mxu0 %v1955
          %2512 = vmatmul.bf16.gmra.mxu0 %v1166
          %v2513 = vpop.f32.mrf.mxu0
          %v2514 = vadd.f32 %v1367, %v2513
          %v2515 = vpop.f32.mrf.mxu0
          %v2516 = vadd.f32 %v1367, %v2515
          %2517 = vdwg.mxu0
          %2518 = vmatpush.bf16.msra.mxu0 %v2045
          %2519 = vmatpush.bf16.msra.mxu0 %v2039
          %2520 = vmatpush.bf16.msra.mxu0 %v2033
          %2521 = vmatpush.bf16.msra.mxu0 %v2027
          %2522 = vmatpush.bf16.msra.mxu0 %v2021
          %2523 = vmatpush.bf16.msra.mxu0 %v2015
          %2524 = vmatpush.bf16.msra.mxu0 %v2009
          %2525 = vmatpush.bf16.msra.mxu0 %v2003
          %2526 = vmatmul.bf16.gmra.mxu0 %v1167
          %v2527 = vpop.f32.mrf.mxu0
          %v2528 = vadd.f32 %v2514, %v2527
          %v2529 = vpop.f32.mrf.mxu0
          %v2530 = vadd.f32 %v2516, %v2529
          %2531 = vdwg.mxu0
          %2532 = vmatpush.bf16.msra.mxu0 %v2093
          %2533 = vmatpush.bf16.msra.mxu0 %v2087
          %2534 = vmatpush.bf16.msra.mxu0 %v2081
          %2535 = vmatpush.bf16.msra.mxu0 %v2075
          %2536 = vmatpush.bf16.msra.mxu0 %v2069
          %2537 = vmatpush.bf16.msra.mxu0 %v2063
          %2538 = vmatpush.bf16.msra.mxu0 %v2057
          %2539 = vmatpush.bf16.msra.mxu0 %v2051
          %2540 = vmatmul.bf16.gmra.mxu0 %v1168
          %v2541 = vpop.f32.mrf.mxu0
          %v2542 = vadd.f32 %v2528, %v2541
          %v2543 = vpop.f32.mrf.mxu0
          %v2544 = vadd.f32 %v2530, %v2543
          %2545 = vdwg.mxu0
          %2546 = vmatpush.bf16.msra.mxu0 %v2141
          %2547 = vmatpush.bf16.msra.mxu0 %v2135
          %2548 = vmatpush.bf16.msra.mxu0 %v2129
          %2549 = vmatpush.bf16.msra.mxu0 %v2123
          %2550 = vmatpush.bf16.msra.mxu0 %v2117
          %2551 = vmatpush.bf16.msra.mxu0 %v2111
          %2552 = vmatpush.bf16.msra.mxu0 %v2105
          %2553 = vmatpush.bf16.msra.mxu0 %v2099
          %2554 = vmatmul.bf16.gmra.mxu0 %v1169
          %v2555 = vpop.f32.mrf.mxu0
          %v2556 = vadd.f32 %v2542, %v2555
          %v2557 = vpop.f32.mrf.mxu0
          %v2558 = vadd.f32 %v2544, %v2557
          %2559 = vdwg.mxu0
          %2560 = vmatpush.bf16.msra.mxu0 %v1998
          %2561 = vmatpush.bf16.msra.mxu0 %v1992
          %2562 = vmatpush.bf16.msra.mxu0 %v1986
          %2563 = vmatpush.bf16.msra.mxu0 %v1980
          %2564 = vmatpush.bf16.msra.mxu0 %v1974
          %2565 = vmatpush.bf16.msra.mxu0 %v1968
          %2566 = vmatpush.bf16.msra.mxu0 %v1962
          %2567 = vmatpush.bf16.msra.mxu0 %v1956
          %2568 = vmatmul.bf16.gmra.mxu0 %v1166
          %v2569 = vpop.f32.mrf.mxu0
          %v2570 = vadd.f32 %v1368, %v2569
          %v2571 = vpop.f32.mrf.mxu0
          %v2572 = vadd.f32 %v1368, %v2571
          %2573 = vdwg.mxu0
          %2574 = vmatpush.bf16.msra.mxu0 %v2046
          %2575 = vmatpush.bf16.msra.mxu0 %v2040
          %2576 = vmatpush.bf16.msra.mxu0 %v2034
          %2577 = vmatpush.bf16.msra.mxu0 %v2028
          %2578 = vmatpush.bf16.msra.mxu0 %v2022
          %2579 = vmatpush.bf16.msra.mxu0 %v2016
          %2580 = vmatpush.bf16.msra.mxu0 %v2010
          %2581 = vmatpush.bf16.msra.mxu0 %v2004
          %2582 = vmatmul.bf16.gmra.mxu0 %v1167
          %v2583 = vpop.f32.mrf.mxu0
          %v2584 = vadd.f32 %v2570, %v2583
          %v2585 = vpop.f32.mrf.mxu0
          %v2586 = vadd.f32 %v2572, %v2585
          %2587 = vdwg.mxu0
          %2588 = vmatpush.bf16.msra.mxu0 %v2094
          %2589 = vmatpush.bf16.msra.mxu0 %v2088
          %2590 = vmatpush.bf16.msra.mxu0 %v2082
          %2591 = vmatpush.bf16.msra.mxu0 %v2076
          %2592 = vmatpush.bf16.msra.mxu0 %v2070
          %2593 = vmatpush.bf16.msra.mxu0 %v2064
          %2594 = vmatpush.bf16.msra.mxu0 %v2058
          %2595 = vmatpush.bf16.msra.mxu0 %v2052
          %2596 = vmatmul.bf16.gmra.mxu0 %v1168
          %v2597 = vpop.f32.mrf.mxu0
          %v2598 = vadd.f32 %v2584, %v2597
          %v2599 = vpop.f32.mrf.mxu0
          %v2600 = vadd.f32 %v2586, %v2599
          %2601 = vdwg.mxu0
          %2602 = vmatpush.bf16.msra.mxu0 %v2142
          %2603 = vmatpush.bf16.msra.mxu0 %v2136
          %2604 = vmatpush.bf16.msra.mxu0 %v2130
          %2605 = vmatpush.bf16.msra.mxu0 %v2124
          %2606 = vmatpush.bf16.msra.mxu0 %v2118
          %2607 = vmatpush.bf16.msra.mxu0 %v2112
          %2608 = vmatpush.bf16.msra.mxu0 %v2106
          %2609 = vmatpush.bf16.msra.mxu0 %v2100
          %2610 = vmatmul.bf16.gmra.mxu0 %v1169
          %v2611 = vpop.f32.mrf.mxu0
          %v2612 = vadd.f32 %v2598, %v2611
          %v2613 = vpop.f32.mrf.mxu0
          %v2614 = vadd.f32 %v2600, %v2613
          %2615 = vdwg.mxu0
          %2616 = vmatpush.bf16.msra.mxu0 %v1999
          %2617 = vmatpush.bf16.msra.mxu0 %v1993
          %2618 = vmatpush.bf16.msra.mxu0 %v1987
          %2619 = vmatpush.bf16.msra.mxu0 %v1981
          %2620 = vmatpush.bf16.msra.mxu0 %v1975
          %2621 = vmatpush.bf16.msra.mxu0 %v1969
          %2622 = vmatpush.bf16.msra.mxu0 %v1963
          %2623 = vmatpush.bf16.msra.mxu0 %v1957
          %2624 = vmatmul.bf16.gmra.mxu0 %v1166
          %v2625 = vpop.f32.mrf.mxu0
          %v2626 = vadd.f32 %v1369, %v2625
          %v2627 = vpop.f32.mrf.mxu0
          %v2628 = vadd.f32 %v1369, %v2627
          %2629 = vdwg.mxu0
          %2630 = vmatpush.bf16.msra.mxu0 %v2047
          %2631 = vmatpush.bf16.msra.mxu0 %v2041
          %2632 = vmatpush.bf16.msra.mxu0 %v2035
          %2633 = vmatpush.bf16.msra.mxu0 %v2029
          %2634 = vmatpush.bf16.msra.mxu0 %v2023
          %2635 = vmatpush.bf16.msra.mxu0 %v2017
          %2636 = vmatpush.bf16.msra.mxu0 %v2011
          %2637 = vmatpush.bf16.msra.mxu0 %v2005
          %2638 = vmatmul.bf16.gmra.mxu0 %v1167
          %v2639 = vpop.f32.mrf.mxu0
          %v2640 = vadd.f32 %v2626, %v2639
          %v2641 = vpop.f32.mrf.mxu0
          %v2642 = vadd.f32 %v2628, %v2641
          %2643 = vdwg.mxu0
          %2644 = vmatpush.bf16.msra.mxu0 %v2095
          %2645 = vmatpush.bf16.msra.mxu0 %v2089
          %2646 = vmatpush.bf16.msra.mxu0 %v2083
          %2647 = vmatpush.bf16.msra.mxu0 %v2077
          %2648 = vmatpush.bf16.msra.mxu0 %v2071
          %2649 = vmatpush.bf16.msra.mxu0 %v2065
          %2650 = vmatpush.bf16.msra.mxu0 %v2059
          %2651 = vmatpush.bf16.msra.mxu0 %v2053
          %2652 = vmatmul.bf16.gmra.mxu0 %v1168
          %v2653 = vpop.f32.mrf.mxu0
          %v2654 = vadd.f32 %v2640, %v2653
          %v2655 = vpop.f32.mrf.mxu0
          %v2656 = vadd.f32 %v2642, %v2655
          %2657 = vdwg.mxu0
          %2658 = vmatpush.bf16.msra.mxu0 %v2143
          %2659 = vmatpush.bf16.msra.mxu0 %v2137
          %2660 = vmatpush.bf16.msra.mxu0 %v2131
          %2661 = vmatpush.bf16.msra.mxu0 %v2125
          %2662 = vmatpush.bf16.msra.mxu0 %v2119
          %2663 = vmatpush.bf16.msra.mxu0 %v2113
          %2664 = vmatpush.bf16.msra.mxu0 %v2107
          %2665 = vmatpush.bf16.msra.mxu0 %v2101
          %2666 = vmatmul.bf16.gmra.mxu0 %v1169
          %v2667 = vpop.f32.mrf.mxu0
          %v2668 = vadd.f32 %v2654, %v2667
          %v2669 = vpop.f32.mrf.mxu0
          %v2670 = vadd.f32 %v2656, %v2669
          %2671 = vdwg.mxu0
          %2672 = vst [vmem:[#allocation12] sm:$0xff] %v2388
          %2673 = vst [vmem:[#allocation12 + $0x8] sm:$0xff] %v2444
          %2674 = vst [vmem:[#allocation12 + $0x10] sm:$0xff] %v2500
          %2675 = vst [vmem:[#allocation12 + $0x18] sm:$0xff] %v2556
          %2676 = vst [vmem:[#allocation12 + $0x20] sm:$0xff] %v2612
          %2677 = vst [vmem:[#allocation12 + $0x28] sm:$0xff] %v2668
          %2678 = vst [vmem:[#allocation12 + $0x30] sm:$0xff] %v2390
          %2679 = vst [vmem:[#allocation12 + $0x38] sm:$0xff] %v2446
          %2680 = vst [vmem:[#allocation12 + $0x40] sm:$0xff] %v2502
          %2681 = vst [vmem:[#allocation12 + $0x48] sm:$0xff] %v2558
          %2682 = vst [vmem:[#allocation12 + $0x50] sm:$0xff] %v2614
          %2683 = vst [vmem:[#allocation12 + $0x58] sm:$0xff] %v2670
        $region68: #{tpu_custom_call.1} parent=39 // pred_fallthru
          _
        // Predicated region
        $region69: #{tpu_custom_call.1} parent=39 // pred_check
          %p2684 = pneg %p171
        $region70: #{tpu_custom_call.1} parent=39 // pred_check_branch
          %2686 = sbr.rel (%p2684) target = $region72
        $region71: #{tpu_custom_call.1} parent=39 // pred_region
          %s2687 = smul.u32 2, %s28
          %2689 = vsyncadd [#allocation5], 0
          %s2690 = smul.addr %s2687, 6
          %s2691 = smul.addr %s2690, 8
          %s2692 = scalar_lea.hbm %s5, %s2691
          %s2693 = sshll.u32 [#allocation12], 4
          %s2694 = int_to_ptr.vmem [resolvable:$true] %s2693
          %s2695 = sshll.u32 %s2692, 4
          %s2696 = int_to_ptr.hbm [resolvable:$true] %s2695
          %2701 = dma.vmem_to_hbm [thread:$0]  %s2694, 1536, %s2696, [#allocation5], 768, 768, 48
        $region72: #{tpu_custom_call.1} parent=39 // pred_fallthru
          _
        // Predicated region
        $region73: #{tpu_custom_call.1} parent=39 // pred_check
          %p2702 = pneg %p171
        $region74: #{tpu_custom_call.1} parent=39 // pred_check_branch
          %2704 = sbr.rel (%p2702) target = $region76
        $region75: #{tpu_custom_call.1} parent=39 // pred_region
          %2706 = dma.done [#allocation5], 1536
        $region76: #{tpu_custom_call.1} parent=39 // pred_fallthru
          _
      $region40: #{tpu_custom_call.1} parent=5 // pred_fallthru
        _
      %p2707 = scmp.le.s32.totalorder 2, %s19
      // Predicated region
      $region77: #{tpu_custom_call.1} parent=5 // pred_check
        %p2708 = pneg %p2707
      $region78: #{tpu_custom_call.1} parent=5 // pred_check_branch
        %2710 = sbr.rel (%p2708) target = $region80
      $region79: #{tpu_custom_call.1} parent=5 // pred_region
        %s2711 = ssub.s32 %s19, 2
      $region80: #{tpu_custom_call.1} parent=5 // pred_fallthru
        _
    $region6: #{tpu_custom_call.1} parent=1 // loop_footer
      %s23 = sadd.s32 1, %s19
    $region7: #{tpu_custom_call.1} parent=1 // loop_footer_branch
      %18 = sbr.rel target = $region3
    $region8: #{tpu_custom_call.1} parent=1 // loop_exit
      _
    %2712 = vsyncpa [#allocation4], 1
    %s2713 = scalar_lea.sflag [#allocation4], 1
    %2714 = vsyncpa %s2713, 1
    %2715 = vsyncpa [#allocation7], 1
    %s2716 = scalar_lea.sflag [#allocation7], 1
    %2717 = vsyncpa %s2716, 1
    %2718 = vsyncpa [#allocation10], 1
    %2719 = vsyncpa [#allocation5], 1
    %s2720 = scalar_lea.sflag [#allocation5], 1
    %2721 = vsyncpa %s2720, 1

</llo_original>
